<compile_context>
chip_gen: v5e
topology: v5e:2x2
jax: 0.10.0
libtpu: 0.0.40
codegen_flags: <defaults>
</compile_context>

<pallas_src>
import functools
import math

import jax
import jax.numpy as jnp
from jax.experimental import pallas as pl
from jax.experimental.pallas import tpu as pltpu


CFG = dict(
    vocab=128, max_pos=32, type_vocab=2,
    hidden=128, heads=4, head_dim=32, inter=256, layers=2,
    num_int=7, num_ner=72,           # snips: 7 intents, 72 slot tags
)
PAD_N = 128                          # lane-dense padded width for the heads
NEG_INF = -1e9


# --------------------------------------------------------------------------
# Fused Pallas kernel: one (batch, layer) grid step of the BERT encoder,
# plus pooler + intent/NER heads on the last layer step.
# --------------------------------------------------------------------------

def _nlu_kernel(
        h_emb_ref, kmask_ref,
        emb_g_ref, emb_b_ref,
        wqkv_ref, bqkv_ref, wo_ref, bo_ref, ln1_g_ref, ln1_b_ref,
        wi_ref, bi_ref, wf_ref, bf_ref, ln2_g_ref, ln2_b_ref,
        pool_w_ref, pool_b_ref, int_w_ref, int_b_ref, ner_w_ref, ner_b_ref,
        int_ref, ner_ref,
        h_acc,
        *, num_layers, num_heads, scale, eps):
    f32 = jnp.float32
    bf16 = jnp.bfloat16
    lidx = pl.program_id(1)
    nh = num_heads

    def layernorm(x, g, b):
        mu = jnp.mean(x, axis=-1, keepdims=True)
        var = jnp.mean(jnp.square(x - mu), axis=-1, keepdims=True)
        return (x - mu) * jax.lax.rsqrt(var + eps) * g + b

    def gelu(y):
        # TODO(synk): HF BERT uses exact erf-GELU; tanh approximation here
        # (erf has no guaranteed Mosaic lowering) -- tiny numerical delta.
        c = jnp.float32(math.sqrt(2.0 / math.pi))
        return 0.5 * y * (1.0 + jnp.tanh(c * (y + 0.044715 * y * y * y)))

    def mm(x, w_bf16):
        # bf16 MXU operands, f32 accumulation.
        return jnp.dot(x.astype(bf16), w_bf16, preferred_element_type=f32)

    # ---- per-sequence init: embedding LayerNorm into the resident scratch ----
    @pl.when(lidx == 0)
    def _():
        h_acc[...] = layernorm(h_emb_ref[...].astype(f32),
                               emb_g_ref[...], emb_b_ref[...])

    h = h_acc[...]                                              # (S, H) f32
    S, H = h.shape

    # ---- head-batched fused QKV projection (bf16 MXU, full-H contraction) ----
    x_b = jnp.broadcast_to(h.astype(bf16), (3 * nh, S, H))       # (3nh, S, H)
    qkv = jnp.einsum("gsh,gdh->gsd", x_b, wqkv_ref[...],
                     preferred_element_type=f32) + bqkv_ref[...]  # (3nh, S, dh)
    q, k, v = qkv[0:nh], qkv[nh:2 * nh], qkv[2 * nh:3 * nh]       # (nh, S, dh)

    # ---- multi-head attention, per-sequence (1,S) key-padding mask ----------
    s = jnp.einsum("nqd,nkd->nqk", q.astype(bf16), k.astype(bf16),
                   preferred_element_type=f32) * scale            # (nh, S, S)
    s = s + kmask_ref[...][None, :, :]                            # broadcast (1,1,S)
    s = s - jnp.max(s, axis=-1, keepdims=True)
    p = jnp.exp(s)
    p = p * pl.reciprocal(jnp.sum(p, axis=-1, keepdims=True), approx=True)

    ctx = jnp.einsum("nqk,nkd->nqd", p.astype(bf16), v.astype(bf16),
                     preferred_element_type=f32)                  # (nh, S, dh)
    proj = jnp.einsum("nsd,ndh->nsh", ctx.astype(bf16), wo_ref[...],
                      preferred_element_type=f32)                 # (nh, S, H)
    attn = proj[0]
    for n in range(1, nh):                                        # sum over heads
        attn = attn + proj[n]
    attn = attn + bo_ref[...]

    h1 = layernorm(attn + h, ln1_g_ref[...], ln1_b_ref[...])

    # ---- feed forward --------------------------------------------------------
    ff = gelu(mm(h1, wi_ref[...]) + bi_ref[...])                  # (S, I) f32
    ff = mm(ff, wf_ref[...]) + bf_ref[...]                        # (S, H) f32
    h2 = layernorm(ff + h1, ln2_g_ref[...], ln2_b_ref[...])
    h_acc[...] = h2

    # ---- last layer: pooler (CLS row only) + classification heads -----------
    @pl.when(lidx == num_layers - 1)
    def _():
        cls = h2[0:1, :]                                          # (1, H) CLS row
        pooled = jnp.tanh(mm(cls, pool_w_ref[...]) + pool_b_ref[...])
        int_ref[...] = (mm(pooled, int_w_ref[...])
                        + int_b_ref[...]).astype(int_ref.dtype)   # (1, PAD_N)
        ner_ref[...] = (mm(h2, ner_w_ref[...])
                        + ner_b_ref[...]).astype(ner_ref.dtype)   # (S, PAD_N)


# --------------------------------------------------------------------------
# Parameters (random stand-in for the pretrained BERT), head-major relayout
# --------------------------------------------------------------------------

def init_params(key):
    c = CFG
    H, I, L = c["hidden"], c["inter"], c["layers"]
    nh, dh = c["heads"], c["head_dim"]
    kit = iter(jax.random.split(key, 12))
    bf16 = jnp.bfloat16

    def rnd(shape):
        return jax.random.normal(next(kit), shape, jnp.float32) * 0.02

    # conventional (in_features, out_features) weights, then head-major relayout
    wq, wk, wv, wo = rnd((L, H, H)), rnd((L, H, H)), rnd((L, H, H)), rnd((L, H, H))
    wi, wf = rnd((L, H, I)), rnd((L, I, H))
    word, pos, typ = rnd((c["vocab"], H)), rnd((c["max_pos"], H)), rnd((c["type_vocab"], H))
    pool = rnd((H, H))
    fc_int, fc_ner = rnd((H, c["num_int"])), rnd((H, c["num_ner"]))

    def head_major(w):   # (L, H_in, H_out) -> (L, nh, dh, H_in)
        return jnp.transpose(w.reshape(L, H, nh, dh), (0, 2, 3, 1))

    wqkv_h = jnp.concatenate([head_major(wq), head_major(wk), head_major(wv)],
                             axis=1).astype(bf16)                 # (L, 3nh, dh, H)
    wo_h = wo.reshape(L, nh, dh, H).astype(bf16)                  # (L, nh, dh, H)

    return {
        "word_emb": word, "pos_emb": pos, "type_emb": typ,
        "emb_ln_g": jnp.ones((1, H), jnp.float32),
        "emb_ln_b": jnp.zeros((1, H), jnp.float32),
        "wqkv": wqkv_h,
        "bqkv": jnp.zeros((L, 3 * nh, 1, dh), jnp.float32),
        "wo": wo_h,
        "bo": jnp.zeros((L, 1, H), jnp.float32),
        "ln1_g": jnp.ones((L, 1, H), jnp.float32),
        "ln1_b": jnp.zeros((L, 1, H), jnp.float32),
        "wi": wi.astype(bf16), "bi": jnp.zeros((L, 1, I), jnp.float32),
        "wf": wf.astype(bf16), "bf": jnp.zeros((L, 1, H), jnp.float32),
        "ln2_g": jnp.ones((L, 1, H), jnp.float32),
        "ln2_b": jnp.zeros((L, 1, H), jnp.float32),
        "pooler_w": pool.astype(bf16),
        "pooler_b": jnp.zeros((1, H), jnp.float32),
        # classification heads, zero-padded to lane-dense 128 output columns
        "fc_int_w": jnp.zeros((H, PAD_N), jnp.float32).at[:, :c["num_int"]].set(fc_int).astype(bf16),
        "fc_int_b": jnp.zeros((1, PAD_N), jnp.float32),
        "fc_ner_w": jnp.zeros((H, PAD_N), jnp.float32).at[:, :c["num_ner"]].set(fc_ner).astype(bf16),
        "fc_ner_b": jnp.zeros((1, PAD_N), jnp.float32),
    }


# --------------------------------------------------------------------------
# Forward wrapper
# --------------------------------------------------------------------------

def nlu_forward(params, ids, mask, token_type_ids):
    """Matches NLU_model.forward: returns (INT_logit, NER_logit)."""
    c = CFG
    B, S = ids.shape
    H, nh, dh = c["hidden"], c["heads"], c["head_dim"]
    L, I = c["layers"], c["inter"]

    # TODO(synk): embedding-table gathers (word/pos/type) stay in plain JAX
    # glue (XLA gather); a DMA-gather Pallas kernel adds nothing at this size.
    h_emb = (params["word_emb"][ids]
             + params["pos_emb"][:S][None, :, :]
             + params["type_emb"][token_type_ids])                 # (B, S, H) f32

    # per-sequence additive key-padding mask (B, 1, S) -- no dense (BS,BS) slab
    kmask = jnp.where(mask > 0, 0.0, NEG_INF).astype(jnp.float32)[:, None, :]

    kernel = functools.partial(
        _nlu_kernel, num_layers=L, num_heads=nh,
        scale=1.0 / math.sqrt(dh), eps=1e-12)

    def per_batch(shape):
        return pl.BlockSpec((None,) + shape, lambda b, l: (b,) + (0,) * len(shape))

    def per_layer(shape):
        return pl.BlockSpec((None,) + shape, lambda b, l: (l,) + (0,) * len(shape))

    def shared(shape):
        return pl.BlockSpec(shape, lambda b, l: (0,) * len(shape))

    in_specs = [
        per_batch((S, H)),              # h_emb
        per_batch((1, S)),              # kmask
        shared((1, H)), shared((1, H)),                       # emb LN g/b
        per_layer((3 * nh, dh, H)), per_layer((3 * nh, 1, dh)),  # wqkv / bqkv
        per_layer((nh, dh, H)), per_layer((1, H)),               # wo / bo
        per_layer((1, H)), per_layer((1, H)),                    # ln1 g/b
        per_layer((H, I)), per_layer((1, I)),                    # wi / bi
        per_layer((I, H)), per_layer((1, H)),                    # wf / bf
        per_layer((1, H)), per_layer((1, H)),                    # ln2 g/b
        shared((H, H)), shared((1, H)),                          # pooler
        shared((H, PAD_N)), shared((1, PAD_N)),                  # intent head
        shared((H, PAD_N)), shared((1, PAD_N)),                  # NER head
    ]
    out_specs = [
        pl.BlockSpec((None, 1, PAD_N), lambda b, l: (b, 0, 0)),  # intent (CLS only)
        pl.BlockSpec((None, S, PAD_N), lambda b, l: (b, 0, 0)),  # NER
    ]

    int_all, ner_all = pl.pallas_call(
        kernel,
        out_shape=(jax.ShapeDtypeStruct((B, 1, PAD_N), jnp.float32),
                   jax.ShapeDtypeStruct((B, S, PAD_N), jnp.float32)),
        grid_spec=pltpu.PrefetchScalarGridSpec(
            num_scalar_prefetch=0,
            grid=(B, L),                       # batch parallel, layers streamed
            in_specs=in_specs,
            out_specs=out_specs,
            scratch_shapes=[pltpu.VMEM((S, H), jnp.float32)]),  # resident hidden state
        compiler_params=pltpu.CompilerParams(
            dimension_semantics=("parallel", "arbitrary"),
            vmem_limit_bytes=32 * 1024 * 1024),
    )(h_emb, kmask,
      params["emb_ln_g"], params["emb_ln_b"],
      params["wqkv"], params["bqkv"], params["wo"], params["bo"],
      params["ln1_g"], params["ln1_b"],
      params["wi"], params["bi"], params["wf"], params["bf"],
      params["ln2_g"], params["ln2_b"],
      params["pooler_w"], params["pooler_b"],
      params["fc_int_w"], params["fc_int_b"],
      params["fc_ner_w"], params["fc_ner_b"])

    # drop1 / drop2 are identity in eval mode; slice padded logits back down.
    int_logit = int_all[:, 0, :c["num_int"]]        # (B, num_int)
    ner_logit = ner_all[:, :, :c["num_ner"]]        # (B, S, num_ner)
    return int_logit, ner_logit


# --------------------------------------------------------------------------
# Driver
# --------------------------------------------------------------------------

if __name__ == "__main__":
    key = jax.random.PRNGKey(0)
    k_par, k_ids, k_tt = jax.random.split(key, 3)

    B, S = 2, 8
    params = init_params(k_par)
    ids = jax.random.randint(k_ids, (B, S), 0, CFG["vocab"], dtype=jnp.int32)
    token_type_ids = jax.random.randint(k_tt, (B, S), 0, CFG["type_vocab"], dtype=jnp.int32)
    mask = jnp.ones((B, S), jnp.int32).at[1, 6:].set(0)   # second sequence padded

    int_logit, ner_logit = jax.jit(nlu_forward)(params, ids, mask, token_type_ids)
    jax.block_until_ready((int_logit, ner_logit))

    assert int_logit.shape == (B, CFG["num_int"])
    assert ner_logit.shape == (B, S, CFG["num_ner"])
    assert bool(jnp.all(jnp.isfinite(int_logit))) and bool(jnp.all(jnp.isfinite(ner_logit)))
    print("KERNEL_OK")
</pallas_src>

<mosaic_0001>
module attributes {stable_mosaic.version = 11 : i64} {
  func.func @_nlu_kernel(%arg0: i32, %arg1: i32, %arg2: memref<1x8x128xf32, #tpu.memory_space<vmem>>, %arg3: memref<1x1x8xf32, #tpu.memory_space<vmem>>, %arg4: memref<1x128xf32, #tpu.memory_space<vmem>>, %arg5: memref<1x128xf32, #tpu.memory_space<vmem>>, %arg6: memref<1x12x32x128xbf16, #tpu.memory_space<vmem>>, %arg7: memref<1x12x1x32xf32, #tpu.memory_space<vmem>>, %arg8: memref<1x4x32x128xbf16, #tpu.memory_space<vmem>>, %arg9: memref<1x1x128xf32, #tpu.memory_space<vmem>>, %arg10: memref<1x1x128xf32, #tpu.memory_space<vmem>>, %arg11: memref<1x1x128xf32, #tpu.memory_space<vmem>>, %arg12: memref<1x128x256xbf16, #tpu.memory_space<vmem>>, %arg13: memref<1x1x256xf32, #tpu.memory_space<vmem>>, %arg14: memref<1x256x128xbf16, #tpu.memory_space<vmem>>, %arg15: memref<1x1x128xf32, #tpu.memory_space<vmem>>, %arg16: memref<1x1x128xf32, #tpu.memory_space<vmem>>, %arg17: memref<1x1x128xf32, #tpu.memory_space<vmem>>, %arg18: memref<128x128xbf16, #tpu.memory_space<vmem>>, %arg19: memref<1x128xf32, #tpu.memory_space<vmem>>, %arg20: memref<128x128xbf16, #tpu.memory_space<vmem>>, %arg21: memref<1x128xf32, #tpu.memory_space<vmem>>, %arg22: memref<128x128xbf16, #tpu.memory_space<vmem>>, %arg23: memref<1x128xf32, #tpu.memory_space<vmem>>, %arg24: memref<1x1x128xf32, #tpu.memory_space<vmem>>, %arg25: memref<1x8x128xf32, #tpu.memory_space<vmem>>, %arg26: memref<8x128xf32, #tpu.memory_space<vmem>>) attributes {dimension_semantics = [#tpu.dimension_semantics<parallel>, #tpu.dimension_semantics<arbitrary>], iteration_bounds = array<i64: 2, 2>, scalar_prefetch = 0 : i64, scratch_operands = 1 : i64, tpu.core_type = #tpu.core_type<tc>, window_params = [{transform_indices = @transform_0, window_bounds = array<i64: 1, 8, 128>}, {transform_indices = @transform_1, window_bounds = array<i64: 1, 1, 8>}, {pipeline_mode = #tpu.pipeline_mode<synchronous>, transform_indices = @transform_2, window_bounds = array<i64: 1, 128>}, {pipeline_mode = #tpu.pipeline_mode<synchronous>, transform_indices = @transform_3, window_bounds = array<i64: 1, 128>}, {transform_indices = @transform_4, window_bounds = array<i64: 1, 12, 32, 128>}, {transform_indices = @transform_5, window_bounds = array<i64: 1, 12, 1, 32>}, {transform_indices = @transform_6, window_bounds = array<i64: 1, 4, 32, 128>}, {transform_indices = @transform_7, window_bounds = array<i64: 1, 1, 128>}, {transform_indices = @transform_8, window_bounds = array<i64: 1, 1, 128>}, {transform_indices = @transform_9, window_bounds = array<i64: 1, 1, 128>}, {transform_indices = @transform_10, window_bounds = array<i64: 1, 128, 256>}, {transform_indices = @transform_11, window_bounds = array<i64: 1, 1, 256>}, {transform_indices = @transform_12, window_bounds = array<i64: 1, 256, 128>}, {transform_indices = @transform_13, window_bounds = array<i64: 1, 1, 128>}, {transform_indices = @transform_14, window_bounds = array<i64: 1, 1, 128>}, {transform_indices = @transform_15, window_bounds = array<i64: 1, 1, 128>}, {pipeline_mode = #tpu.pipeline_mode<synchronous>, transform_indices = @transform_16, window_bounds = array<i64: 128, 128>}, {pipeline_mode = #tpu.pipeline_mode<synchronous>, transform_indices = @transform_17, window_bounds = array<i64: 1, 128>}, {pipeline_mode = #tpu.pipeline_mode<synchronous>, transform_indices = @transform_18, window_bounds = array<i64: 128, 128>}, {pipeline_mode = #tpu.pipeline_mode<synchronous>, transform_indices = @transform_19, window_bounds = array<i64: 1, 128>}, {pipeline_mode = #tpu.pipeline_mode<synchronous>, transform_indices = @transform_20, window_bounds = array<i64: 128, 128>}, {pipeline_mode = #tpu.pipeline_mode<synchronous>, transform_indices = @transform_21, window_bounds = array<i64: 1, 128>}, {transform_indices = @transform_22, window_bounds = array<i64: 1, 1, 128>}, {transform_indices = @transform_23, window_bounds = array<i64: 1, 8, 128>}]} {
    %c0_i32 = arith.constant 0 : i32
    %0 = arith.cmpi eq, %arg1, %c0_i32 : i32
    %1 = arith.extui %0 : i1 to i32
    %c0_i32_0 = arith.constant 0 : i32
    %2 = arith.cmpi ne, %1, %c0_i32_0 : i32
    scf.if %2 {
      %c0_69 = arith.constant 0 : index
      %c0_70 = arith.constant 0 : index
      %c0_71 = arith.constant 0 : index
      %146 = vector.load %arg2[%c0_69, %c0_70, %c0_71] : memref<1x8x128xf32, #tpu.memory_space<vmem>>, vector<1x8x128xf32>
      %147 = vector.shape_cast %146 : vector<1x8x128xf32> to vector<8x128xf32>
      %c0_72 = arith.constant 0 : index
      %c0_73 = arith.constant 0 : index
      %148 = vector.load %arg4[%c0_72, %c0_73] : memref<1x128xf32, #tpu.memory_space<vmem>>, vector<1x128xf32>
      %c0_74 = arith.constant 0 : index
      %c0_75 = arith.constant 0 : index
      %149 = vector.load %arg5[%c0_74, %c0_75] : memref<1x128xf32, #tpu.memory_space<vmem>>, vector<1x128xf32>
      %cst_76 = arith.constant dense<0.000000e+00> : vector<8xf32>
      %150 = vector.multi_reduction <add>, %147, %cst_76 [1] : vector<8x128xf32> to vector<8xf32>
      %151 = vector.shape_cast %150 : vector<8xf32> to vector<8x1xf32>
      %cst_77 = arith.constant 1.280000e+02 : f32
      %152 = vector.broadcast %cst_77 : f32 to vector<8x1xf32>
      %153 = arith.divf %151, %152 : vector<8x1xf32>
      %154 = vector.broadcast %153 : vector<8x1xf32> to vector<8x128xf32>
      %155 = arith.subf %147, %154 : vector<8x128xf32>
      %156 = arith.mulf %155, %155 : vector<8x128xf32>
      %cst_78 = arith.constant dense<0.000000e+00> : vector<8xf32>
      %157 = vector.multi_reduction <add>, %156, %cst_78 [1] : vector<8x128xf32> to vector<8xf32>
      %158 = vector.shape_cast %157 : vector<8xf32> to vector<8x1xf32>
      %cst_79 = arith.constant 1.280000e+02 : f32
      %159 = vector.broadcast %cst_79 : f32 to vector<8x1xf32>
      %160 = arith.divf %158, %159 : vector<8x1xf32>
      %161 = vector.broadcast %153 : vector<8x1xf32> to vector<8x128xf32>
      %162 = arith.subf %147, %161 : vector<8x128xf32>
      %cst_80 = arith.constant 9.99999996E-13 : f32
      %163 = vector.broadcast %cst_80 : f32 to vector<8x1xf32>
      %164 = arith.addf %160, %163 : vector<8x1xf32>
      %165 = math.rsqrt %164 : vector<8x1xf32>
      %166 = vector.broadcast %165 : vector<8x1xf32> to vector<8x128xf32>
      %167 = arith.mulf %162, %166 : vector<8x128xf32>
      %168 = vector.broadcast %148 : vector<1x128xf32> to vector<8x128xf32>
      %169 = arith.mulf %167, %168 : vector<8x128xf32>
      %170 = vector.broadcast %149 : vector<1x128xf32> to vector<8x128xf32>
      %171 = arith.addf %169, %170 : vector<8x128xf32>
      %c0_81 = arith.constant 0 : index
      %c0_82 = arith.constant 0 : index
      %172 = vector.load %arg26[%c0_81, %c0_82] : memref<8x128xf32, #tpu.memory_space<vmem>>, vector<8x128xf32>
      tpu.vector_store %arg26[%c0_81, %c0_82], %171 {strides = array<i32>} : memref<8x128xf32, #tpu.memory_space<vmem>>, vector<8x128xf32>,
    } else {
    }
    %c0 = arith.constant 0 : index
    %c0_1 = arith.constant 0 : index
    %3 = vector.load %arg26[%c0, %c0_1] : memref<8x128xf32, #tpu.memory_space<vmem>>, vector<8x128xf32>
    %4 = arith.truncf %3 : vector<8x128xf32> to vector<8x128xbf16>
    %5 = vector.shape_cast %4 : vector<8x128xbf16> to vector<1x8x128xbf16>
    %6 = vector.broadcast %5 : vector<1x8x128xbf16> to vector<12x8x128xbf16>
    %c0_2 = arith.constant 0 : index
    %c0_3 = arith.constant 0 : index
    %c0_4 = arith.constant 0 : index
    %c0_5 = arith.constant 0 : index
    %7 = vector.load %arg6[%c0_2, %c0_3, %c0_4, %c0_5] : memref<1x12x32x128xbf16, #tpu.memory_space<vmem>>, vector<1x12x32x128xbf16>
    %8 = vector.shape_cast %7 : vector<1x12x32x128xbf16> to vector<12x32x128xbf16>
    "tpu.trace_start"() <{level = 10 : i32, message = "gsh,gdh->gsd"}> : () -> ()
    %cst = arith.constant dense<0.000000e+00> : vector<12x8x32xf32>
    %9 = tpu.matmul %6, %8, %cst {dimension_numbers = #tpu.dot_dimension_numbers<[2], [2], [1], [1], [0, 0, 0, 1, 1, 1], [0], [0]>} : vector<12x8x128xbf16>, vector<12x32x128xbf16>, vector<12x8x32xf32> -> vector<12x8x32xf32>
    "tpu.trace_stop"() : () -> ()
    %c0_6 = arith.constant 0 : index
    %c0_7 = arith.constant 0 : index
    %c0_8 = arith.constant 0 : index
    %c0_9 = arith.constant 0 : index
    %10 = vector.load %arg7[%c0_6, %c0_7, %c0_8, %c0_9] : memref<1x12x1x32xf32, #tpu.memory_space<vmem>>, vector<1x12x1x32xf32>
    %11 = vector.shape_cast %10 : vector<1x12x1x32xf32> to vector<12x1x32xf32>
    %12 = vector.broadcast %11 : vector<12x1x32xf32> to vector<12x8x32xf32>
    %13 = arith.addf %9, %12 : vector<12x8x32xf32>
    %14 = vector.extract_strided_slice %13 {offsets = [0, 0, 0], sizes = [4, 8, 32], strides = [1, 1, 1]} : vector<12x8x32xf32> to vector<4x8x32xf32>
    %15 = vector.extract_strided_slice %13 {offsets = [4, 0, 0], sizes = [4, 8, 32], strides = [1, 1, 1]} : vector<12x8x32xf32> to vector<4x8x32xf32>
    %16 = vector.extract_strided_slice %13 {offsets = [8, 0, 0], sizes = [4, 8, 32], strides = [1, 1, 1]} : vector<12x8x32xf32> to vector<4x8x32xf32>
    %17 = arith.truncf %14 : vector<4x8x32xf32> to vector<4x8x32xbf16>
    %18 = arith.truncf %15 : vector<4x8x32xf32> to vector<4x8x32xbf16>
    "tpu.trace_start"() <{level = 10 : i32, message = "nqd,nkd->nqk"}> : () -> ()
    %cst_10 = arith.constant dense<0.000000e+00> : vector<4x8x8xf32>
    %19 = tpu.matmul %17, %18, %cst_10 {dimension_numbers = #tpu.dot_dimension_numbers<[2], [2], [1], [1], [0, 0, 0, 1, 1, 1], [0], [0]>} : vector<4x8x32xbf16>, vector<4x8x32xbf16>, vector<4x8x8xf32> -> vector<4x8x8xf32>
    "tpu.trace_stop"() : () -> ()
    %cst_11 = arith.constant 0.176776692 : f32
    %20 = vector.broadcast %cst_11 : f32 to vector<4x8x8xf32>
    %21 = arith.mulf %19, %20 : vector<4x8x8xf32>
    %c0_12 = arith.constant 0 : index
    %c0_13 = arith.constant 0 : index
    %c0_14 = arith.constant 0 : index
    %22 = vector.load %arg3[%c0_12, %c0_13, %c0_14] : memref<1x1x8xf32, #tpu.memory_space<vmem>>, vector<1x1x8xf32>
    %23 = vector.shape_cast %22 : vector<1x1x8xf32> to vector<1x8xf32>
    %24 = vector.shape_cast %23 : vector<1x8xf32> to vector<1x1x8xf32>
    %25 = vector.broadcast %24 : vector<1x1x8xf32> to vector<4x8x8xf32>
    %26 = arith.addf %21, %25 : vector<4x8x8xf32>
    %cst_15 = arith.constant dense<0xFF800000> : vector<4x8xf32>
    %27 = vector.multi_reduction <maximumf>, %26, %cst_15 [2] : vector<4x8x8xf32> to vector<4x8xf32>
    %28 = vector.shape_cast %27 : vector<4x8xf32> to vector<4x8x1xf32>
    %29 = vector.broadcast %28 : vector<4x8x1xf32> to vector<4x8x8xf32>
    %30 = arith.subf %26, %29 : vector<4x8x8xf32>
    %31 = math.exp %30 : vector<4x8x8xf32>
    %cst_16 = arith.constant dense<0.000000e+00> : vector<4x8xf32>
    %32 = vector.multi_reduction <add>, %31, %cst_16 [2] : vector<4x8x8xf32> to vector<4x8xf32>
    %33 = vector.shape_cast %32 : vector<4x8xf32> to vector<4x8x1xf32>
    %34 = tpu.reciprocal %33 {approx = true} : vector<4x8x1xf32> -> vector<4x8x1xf32>
    %35 = vector.broadcast %34 : vector<4x8x1xf32> to vector<4x8x8xf32>
    %36 = arith.mulf %31, %35 : vector<4x8x8xf32>
    %37 = arith.truncf %36 : vector<4x8x8xf32> to vector<4x8x8xbf16>
    %38 = arith.truncf %16 : vector<4x8x32xf32> to vector<4x8x32xbf16>
    "tpu.trace_start"() <{level = 10 : i32, message = "nqk,nkd->nqd"}> : () -> ()
    %cst_17 = arith.constant dense<0.000000e+00> : vector<4x8x32xf32>
    %39 = tpu.matmul %37, %38, %cst_17 {dimension_numbers = #tpu.dot_dimension_numbers<[2], [1], [1], [2], [0, 0, 0, 1, 1, 2], [0], [0]>} : vector<4x8x8xbf16>, vector<4x8x32xbf16>, vector<4x8x32xf32> -> vector<4x8x32xf32>
    "tpu.trace_stop"() : () -> ()
    %40 = arith.truncf %39 : vector<4x8x32xf32> to vector<4x8x32xbf16>
    %c0_18 = arith.constant 0 : index
    %c0_19 = arith.constant 0 : index
    %c0_20 = arith.constant 0 : index
    %c0_21 = arith.constant 0 : index
    %41 = vector.load %arg8[%c0_18, %c0_19, %c0_20, %c0_21] : memref<1x4x32x128xbf16, #tpu.memory_space<vmem>>, vector<1x4x32x128xbf16>
    %42 = vector.shape_cast %41 : vector<1x4x32x128xbf16> to vector<4x32x128xbf16>
    "tpu.trace_start"() <{level = 10 : i32, message = "nsd,ndh->nsh"}> : () -> ()
    %cst_22 = arith.constant dense<0.000000e+00> : vector<4x8x128xf32>
    %43 = tpu.matmul %40, %42, %cst_22 {dimension_numbers = #tpu.dot_dimension_numbers<[2], [1], [1], [2], [0, 0, 0, 1, 1, 2], [0], [0]>} : vector<4x8x32xbf16>, vector<4x32x128xbf16>, vector<4x8x128xf32> -> vector<4x8x128xf32>
    "tpu.trace_stop"() : () -> ()
    %44 = vector.extract_strided_slice %43 {offsets = [0, 0, 0], sizes = [1, 8, 128], strides = [1, 1, 1]} : vector<4x8x128xf32> to vector<1x8x128xf32>
    %45 = vector.shape_cast %44 : vector<1x8x128xf32> to vector<8x128xf32>
    %46 = vector.extract_strided_slice %43 {offsets = [1, 0, 0], sizes = [1, 8, 128], strides = [1, 1, 1]} : vector<4x8x128xf32> to vector<1x8x128xf32>
    %47 = vector.shape_cast %46 : vector<1x8x128xf32> to vector<8x128xf32>
    %48 = arith.addf %45, %47 : vector<8x128xf32>
    %49 = vector.extract_strided_slice %43 {offsets = [2, 0, 0], sizes = [1, 8, 128], strides = [1, 1, 1]} : vector<4x8x128xf32> to vector<1x8x128xf32>
    %50 = vector.shape_cast %49 : vector<1x8x128xf32> to vector<8x128xf32>
    %51 = arith.addf %48, %50 : vector<8x128xf32>
    %52 = vector.extract_strided_slice %43 {offsets = [3, 0, 0], sizes = [1, 8, 128], strides = [1, 1, 1]} : vector<4x8x128xf32> to vector<1x8x128xf32>
    %53 = vector.shape_cast %52 : vector<1x8x128xf32> to vector<8x128xf32>
    %54 = arith.addf %51, %53 : vector<8x128xf32>
    %c0_23 = arith.constant 0 : index
    %c0_24 = arith.constant 0 : index
    %c0_25 = arith.constant 0 : index
    %55 = vector.load %arg9[%c0_23, %c0_24, %c0_25] : memref<1x1x128xf32, #tpu.memory_space<vmem>>, vector<1x1x128xf32>
    %56 = vector.shape_cast %55 : vector<1x1x128xf32> to vector<1x128xf32>
    %57 = vector.broadcast %56 : vector<1x128xf32> to vector<8x128xf32>
    %58 = arith.addf %54, %57 : vector<8x128xf32>
    %59 = arith.addf %58, %3 : vector<8x128xf32>
    %c0_26 = arith.constant 0 : index
    %c0_27 = arith.constant 0 : index
    %c0_28 = arith.constant 0 : index
    %60 = vector.load %arg10[%c0_26, %c0_27, %c0_28] : memref<1x1x128xf32, #tpu.memory_space<vmem>>, vector<1x1x128xf32>
    %61 = vector.shape_cast %60 : vector<1x1x128xf32> to vector<1x128xf32>
    %c0_29 = arith.constant 0 : index
    %c0_30 = arith.constant 0 : index
    %c0_31 = arith.constant 0 : index
    %62 = vector.load %arg11[%c0_29, %c0_30, %c0_31] : memref<1x1x128xf32, #tpu.memory_space<vmem>>, vector<1x1x128xf32>
    %63 = vector.shape_cast %62 : vector<1x1x128xf32> to vector<1x128xf32>
    %cst_32 = arith.constant dense<0.000000e+00> : vector<8xf32>
    %64 = vector.multi_reduction <add>, %59, %cst_32 [1] : vector<8x128xf32> to vector<8xf32>
    %65 = vector.shape_cast %64 : vector<8xf32> to vector<8x1xf32>
    %cst_33 = arith.constant 1.280000e+02 : f32
    %66 = vector.broadcast %cst_33 : f32 to vector<8x1xf32>
    %67 = arith.divf %65, %66 : vector<8x1xf32>
    %68 = vector.broadcast %67 : vector<8x1xf32> to vector<8x128xf32>
    %69 = arith.subf %59, %68 : vector<8x128xf32>
    %70 = arith.mulf %69, %69 : vector<8x128xf32>
    %cst_34 = arith.constant dense<0.000000e+00> : vector<8xf32>
    %71 = vector.multi_reduction <add>, %70, %cst_34 [1] : vector<8x128xf32> to vector<8xf32>
    %72 = vector.shape_cast %71 : vector<8xf32> to vector<8x1xf32>
    %cst_35 = arith.constant 1.280000e+02 : f32
    %73 = vector.broadcast %cst_35 : f32 to vector<8x1xf32>
    %74 = arith.divf %72, %73 : vector<8x1xf32>
    %75 = vector.broadcast %67 : vector<8x1xf32> to vector<8x128xf32>
    %76 = arith.subf %59, %75 : vector<8x128xf32>
    %cst_36 = arith.constant 9.99999996E-13 : f32
    %77 = vector.broadcast %cst_36 : f32 to vector<8x1xf32>
    %78 = arith.addf %74, %77 : vector<8x1xf32>
    %79 = math.rsqrt %78 : vector<8x1xf32>
    %80 = vector.broadcast %79 : vector<8x1xf32> to vector<8x128xf32>
    %81 = arith.mulf %76, %80 : vector<8x128xf32>
    %82 = vector.broadcast %61 : vector<1x128xf32> to vector<8x128xf32>
    %83 = arith.mulf %81, %82 : vector<8x128xf32>
    %84 = vector.broadcast %63 : vector<1x128xf32> to vector<8x128xf32>
    %85 = arith.addf %83, %84 : vector<8x128xf32>
    %c0_37 = arith.constant 0 : index
    %c0_38 = arith.constant 0 : index
    %c0_39 = arith.constant 0 : index
    %86 = vector.load %arg12[%c0_37, %c0_38, %c0_39] : memref<1x128x256xbf16, #tpu.memory_space<vmem>>, vector<1x128x256xbf16>
    %87 = vector.shape_cast %86 : vector<1x128x256xbf16> to vector<128x256xbf16>
    %88 = arith.truncf %85 : vector<8x128xf32> to vector<8x128xbf16>
    %cst_40 = arith.constant dense<0.000000e+00> : vector<8x256xf32>
    %89 = tpu.matmul %88, %87, %cst_40 {dimension_numbers = #tpu.dot_dimension_numbers<[1], [0], [0], [1], [0, 0, 1, 1], [], []>} : vector<8x128xbf16>, vector<128x256xbf16>, vector<8x256xf32> -> vector<8x256xf32>
    %c0_41 = arith.constant 0 : index
    %c0_42 = arith.constant 0 : index
    %c0_43 = arith.constant 0 : index
    %90 = vector.load %arg13[%c0_41, %c0_42, %c0_43] : memref<1x1x256xf32, #tpu.memory_space<vmem>>, vector<1x1x256xf32>
    %91 = vector.shape_cast %90 : vector<1x1x256xf32> to vector<1x256xf32>
    %92 = vector.broadcast %91 : vector<1x256xf32> to vector<8x256xf32>
    %93 = arith.addf %89, %92 : vector<8x256xf32>
    %cst_44 = arith.constant 5.000000e-01 : f32
    %94 = vector.broadcast %cst_44 : f32 to vector<8x256xf32>
    %95 = arith.mulf %94, %93 : vector<8x256xf32>
    %cst_45 = arith.constant 4.471500e-02 : f32
    %96 = vector.broadcast %cst_45 : f32 to vector<8x256xf32>
    %97 = arith.mulf %96, %93 : vector<8x256xf32>
    %98 = arith.mulf %97, %93 : vector<8x256xf32>
    %99 = arith.mulf %98, %93 : vector<8x256xf32>
    %100 = arith.addf %93, %99 : vector<8x256xf32>
    %cst_46 = arith.constant 0.797884583 : f32
    %101 = vector.broadcast %cst_46 : f32 to vector<8x256xf32>
    %102 = arith.mulf %101, %100 : vector<8x256xf32>
    %103 = math.tanh %102 : vector<8x256xf32>
    %cst_47 = arith.constant 1.000000e+00 : f32
    %104 = vector.broadcast %cst_47 : f32 to vector<8x256xf32>
    %105 = arith.addf %104, %103 : vector<8x256xf32>
    %106 = arith.mulf %95, %105 : vector<8x256xf32>
    %c0_48 = arith.constant 0 : index
    %c0_49 = arith.constant 0 : index
    %c0_50 = arith.constant 0 : index
    %107 = vector.load %arg14[%c0_48, %c0_49, %c0_50] : memref<1x256x128xbf16, #tpu.memory_space<vmem>>, vector<1x256x128xbf16>
    %108 = vector.shape_cast %107 : vector<1x256x128xbf16> to vector<256x128xbf16>
    %109 = arith.truncf %106 : vector<8x256xf32> to vector<8x256xbf16>
    %cst_51 = arith.constant dense<0.000000e+00> : vector<8x128xf32>
    %110 = tpu.matmul %109, %108, %cst_51 {dimension_numbers = #tpu.dot_dimension_numbers<[1], [0], [0], [1], [0, 0, 1, 1], [], []>} : vector<8x256xbf16>, vector<256x128xbf16>, vector<8x128xf32> -> vector<8x128xf32>
    %c0_52 = arith.constant 0 : index
    %c0_53 = arith.constant 0 : index
    %c0_54 = arith.constant 0 : index
    %111 = vector.load %arg15[%c0_52, %c0_53, %c0_54] : memref<1x1x128xf32, #tpu.memory_space<vmem>>, vector<1x1x128xf32>
    %112 = vector.shape_cast %111 : vector<1x1x128xf32> to vector<1x128xf32>
    %113 = vector.broadcast %112 : vector<1x128xf32> to vector<8x128xf32>
    %114 = arith.addf %110, %113 : vector<8x128xf32>
    %115 = arith.addf %114, %85 : vector<8x128xf32>
    %c0_55 = arith.constant 0 : index
    %c0_56 = arith.constant 0 : index
    %c0_57 = arith.constant 0 : index
    %116 = vector.load %arg16[%c0_55, %c0_56, %c0_57] : memref<1x1x128xf32, #tpu.memory_space<vmem>>, vector<1x1x128xf32>
    %117 = vector.shape_cast %116 : vector<1x1x128xf32> to vector<1x128xf32>
    %c0_58 = arith.constant 0 : index
    %c0_59 = arith.constant 0 : index
    %c0_60 = arith.constant 0 : index
    %118 = vector.load %arg17[%c0_58, %c0_59, %c0_60] : memref<1x1x128xf32, #tpu.memory_space<vmem>>, vector<1x1x128xf32>
    %119 = vector.shape_cast %118 : vector<1x1x128xf32> to vector<1x128xf32>
    %cst_61 = arith.constant dense<0.000000e+00> : vector<8xf32>
    %120 = vector.multi_reduction <add>, %115, %cst_61 [1] : vector<8x128xf32> to vector<8xf32>
    %121 = vector.shape_cast %120 : vector<8xf32> to vector<8x1xf32>
    %cst_62 = arith.constant 1.280000e+02 : f32
    %122 = vector.broadcast %cst_62 : f32 to vector<8x1xf32>
    %123 = arith.divf %121, %122 : vector<8x1xf32>
    %124 = vector.broadcast %123 : vector<8x1xf32> to vector<8x128xf32>
    %125 = arith.subf %115, %124 : vector<8x128xf32>
    %126 = arith.mulf %125, %125 : vector<8x128xf32>
    %cst_63 = arith.constant dense<0.000000e+00> : vector<8xf32>
    %127 = vector.multi_reduction <add>, %126, %cst_63 [1] : vector<8x128xf32> to vector<8xf32>
    %128 = vector.shape_cast %127 : vector<8xf32> to vector<8x1xf32>
    %cst_64 = arith.constant 1.280000e+02 : f32
    %129 = vector.broadcast %cst_64 : f32 to vector<8x1xf32>
    %130 = arith.divf %128, %129 : vector<8x1xf32>
    %131 = vector.broadcast %123 : vector<8x1xf32> to vector<8x128xf32>
    %132 = arith.subf %115, %131 : vector<8x128xf32>
    %cst_65 = arith.constant 9.99999996E-13 : f32
    %133 = vector.broadcast %cst_65 : f32 to vector<8x1xf32>
    %134 = arith.addf %130, %133 : vector<8x1xf32>
    %135 = math.rsqrt %134 : vector<8x1xf32>
    %136 = vector.broadcast %135 : vector<8x1xf32> to vector<8x128xf32>
    %137 = arith.mulf %132, %136 : vector<8x128xf32>
    %138 = vector.broadcast %117 : vector<1x128xf32> to vector<8x128xf32>
    %139 = arith.mulf %137, %138 : vector<8x128xf32>
    %140 = vector.broadcast %119 : vector<1x128xf32> to vector<8x128xf32>
    %141 = arith.addf %139, %140 : vector<8x128xf32>
    %c0_66 = arith.constant 0 : index
    %c0_67 = arith.constant 0 : index
    %142 = vector.load %arg26[%c0_66, %c0_67] : memref<8x128xf32, #tpu.memory_space<vmem>>, vector<8x128xf32>
    tpu.vector_store %arg26[%c0_66, %c0_67], %141 {strides = array<i32>} : memref<8x128xf32, #tpu.memory_space<vmem>>, vector<8x128xf32>,
    %c1_i32 = arith.constant 1 : i32
    %143 = arith.cmpi eq, %arg1, %c1_i32 : i32
    %144 = arith.extui %143 : i1 to i32
    %c0_i32_68 = arith.constant 0 : i32
    %145 = arith.cmpi ne, %144, %c0_i32_68 : i32
    scf.if %145 {
      %146 = vector.extract_strided_slice %141 {offsets = [0, 0], sizes = [1, 128], strides = [1, 1]} : vector<8x128xf32> to vector<1x128xf32>
      %c0_69 = arith.constant 0 : index
      %c0_70 = arith.constant 0 : index
      %147 = vector.load %arg18[%c0_69, %c0_70] : memref<128x128xbf16, #tpu.memory_space<vmem>>, vector<128x128xbf16>
      %148 = arith.truncf %146 : vector<1x128xf32> to vector<1x128xbf16>
      %cst_71 = arith.constant dense<0.000000e+00> : vector<1x128xf32>
      %149 = tpu.matmul %148, %147, %cst_71 {dimension_numbers = #tpu.dot_dimension_numbers<[1], [0], [0], [1], [0, 0, 1, 1], [], []>} : vector<1x128xbf16>, vector<128x128xbf16>, vector<1x128xf32> -> vector<1x128xf32>
      %c0_72 = arith.constant 0 : index
      %c0_73 = arith.constant 0 : index
      %150 = vector.load %arg19[%c0_72, %c0_73] : memref<1x128xf32, #tpu.memory_space<vmem>>, vector<1x128xf32>
      %151 = arith.addf %149, %150 : vector<1x128xf32>
      %152 = math.tanh %151 : vector<1x128xf32>
      %c0_74 = arith.constant 0 : index
      %c0_75 = arith.constant 0 : index
      %153 = vector.load %arg20[%c0_74, %c0_75] : memref<128x128xbf16, #tpu.memory_space<vmem>>, vector<128x128xbf16>
      %154 = arith.truncf %152 : vector<1x128xf32> to vector<1x128xbf16>
      %cst_76 = arith.constant dense<0.000000e+00> : vector<1x128xf32>
      %155 = tpu.matmul %154, %153, %cst_76 {dimension_numbers = #tpu.dot_dimension_numbers<[1], [0], [0], [1], [0, 0, 1, 1], [], []>} : vector<1x128xbf16>, vector<128x128xbf16>, vector<1x128xf32> -> vector<1x128xf32>
      %c0_77 = arith.constant 0 : index
      %c0_78 = arith.constant 0 : index
      %156 = vector.load %arg21[%c0_77, %c0_78] : memref<1x128xf32, #tpu.memory_space<vmem>>, vector<1x128xf32>
      %157 = arith.addf %155, %156 : vector<1x128xf32>
      %c0_79 = arith.constant 0 : index
      %c0_80 = arith.constant 0 : index
      %c0_81 = arith.constant 0 : index
      %158 = vector.load %arg24[%c0_79, %c0_80, %c0_81] : memref<1x1x128xf32, #tpu.memory_space<vmem>>, vector<1x1x128xf32>
      %159 = vector.shape_cast %158 : vector<1x1x128xf32> to vector<1x128xf32>
      %160 = vector.shape_cast %157 : vector<1x128xf32> to vector<1x1x128xf32>
      tpu.vector_store %arg24[%c0_79, %c0_80, %c0_81], %160 {strides = array<i32>} : memref<1x1x128xf32, #tpu.memory_space<vmem>>, vector<1x1x128xf32>,
      %c0_82 = arith.constant 0 : index
      %c0_83 = arith.constant 0 : index
      %161 = vector.load %arg22[%c0_82, %c0_83] : memref<128x128xbf16, #tpu.memory_space<vmem>>, vector<128x128xbf16>
      %162 = arith.truncf %141 : vector<8x128xf32> to vector<8x128xbf16>
      %cst_84 = arith.constant dense<0.000000e+00> : vector<8x128xf32>
      %163 = tpu.matmul %162, %161, %cst_84 {dimension_numbers = #tpu.dot_dimension_numbers<[1], [0], [0], [1], [0, 0, 1, 1], [], []>} : vector<8x128xbf16>, vector<128x128xbf16>, vector<8x128xf32> -> vector<8x128xf32>
      %c0_85 = arith.constant 0 : index
      %c0_86 = arith.constant 0 : index
      %164 = vector.load %arg23[%c0_85, %c0_86] : memref<1x128xf32, #tpu.memory_space<vmem>>, vector<1x128xf32>
      %165 = vector.broadcast %164 : vector<1x128xf32> to vector<8x128xf32>
      %166 = arith.addf %163, %165 : vector<8x128xf32>
      %c0_87 = arith.constant 0 : index
      %c0_88 = arith.constant 0 : index
      %c0_89 = arith.constant 0 : index
      %167 = vector.load %arg25[%c0_87, %c0_88, %c0_89] : memref<1x8x128xf32, #tpu.memory_space<vmem>>, vector<1x8x128xf32>
      %168 = vector.shape_cast %167 : vector<1x8x128xf32> to vector<8x128xf32>
      %169 = vector.shape_cast %166 : vector<8x128xf32> to vector<1x8x128xf32>
      tpu.vector_store %arg25[%c0_87, %c0_88, %c0_89], %169 {strides = array<i32>} : memref<1x8x128xf32, #tpu.memory_space<vmem>>, vector<1x8x128xf32>,
    } else {
    }
    return
  }
  func.func @transform_0(%arg0: i32, %arg1: i32) -> (i32, i32, i32) {
    %c0_i32 = arith.constant 0 : i32
    %c0_i32_0 = arith.constant 0 : i32
    %c0_i32_1 = arith.constant 0 : i32
    return %arg0, %c0_i32, %c0_i32_0 : i32, i32, i32
  }
  func.func @transform_1(%arg0: i32, %arg1: i32) -> (i32, i32, i32) {
    %c0_i32 = arith.constant 0 : i32
    %c0_i32_0 = arith.constant 0 : i32
    %c0_i32_1 = arith.constant 0 : i32
    return %arg0, %c0_i32, %c0_i32_0 : i32, i32, i32
  }
  func.func @transform_2(%arg0: i32, %arg1: i32) -> (i32, i32) {
    %c0_i32 = arith.constant 0 : i32
    %c0_i32_0 = arith.constant 0 : i32
    %c0_i32_1 = arith.constant 0 : i32
    return %c0_i32, %c0_i32_0 : i32, i32
  }
  func.func @transform_3(%arg0: i32, %arg1: i32) -> (i32, i32) {
    %c0_i32 = arith.constant 0 : i32
    %c0_i32_0 = arith.constant 0 : i32
    %c0_i32_1 = arith.constant 0 : i32
    return %c0_i32, %c0_i32_0 : i32, i32
  }
  func.func @transform_4(%arg0: i32, %arg1: i32) -> (i32, i32, i32, i32) {
    %c0_i32 = arith.constant 0 : i32
    %c0_i32_0 = arith.constant 0 : i32
    %c0_i32_1 = arith.constant 0 : i32
    %c0_i32_2 = arith.constant 0 : i32
    return %arg1, %c0_i32, %c0_i32_0, %c0_i32_1 : i32, i32, i32, i32
  }
  func.func @transform_5(%arg0: i32, %arg1: i32) -> (i32, i32, i32, i32) {
    %c0_i32 = arith.constant 0 : i32
    %c0_i32_0 = arith.constant 0 : i32
    %c0_i32_1 = arith.constant 0 : i32
    %c0_i32_2 = arith.constant 0 : i32
    return %arg1, %c0_i32, %c0_i32_0, %c0_i32_1 : i32, i32, i32, i32
  }
  func.func @transform_6(%arg0: i32, %arg1: i32) -> (i32, i32, i32, i32) {
    %c0_i32 = arith.constant 0 : i32
    %c0_i32_0 = arith.constant 0 : i32
    %c0_i32_1 = arith.constant 0 : i32
    %c0_i32_2 = arith.constant 0 : i32
    return %arg1, %c0_i32, %c0_i32_0, %c0_i32_1 : i32, i32, i32, i32
  }
  func.func @transform_7(%arg0: i32, %arg1: i32) -> (i32, i32, i32) {
    %c0_i32 = arith.constant 0 : i32
    %c0_i32_0 = arith.constant 0 : i32
    %c0_i32_1 = arith.constant 0 : i32
    return %arg1, %c0_i32, %c0_i32_0 : i32, i32, i32
  }
  func.func @transform_8(%arg0: i32, %arg1: i32) -> (i32, i32, i32) {
    %c0_i32 = arith.constant 0 : i32
    %c0_i32_0 = arith.constant 0 : i32
    %c0_i32_1 = arith.constant 0 : i32
    return %arg1, %c0_i32, %c0_i32_0 : i32, i32, i32
  }
  func.func @transform_9(%arg0: i32, %arg1: i32) -> (i32, i32, i32) {
    %c0_i32 = arith.constant 0 : i32
    %c0_i32_0 = arith.constant 0 : i32
    %c0_i32_1 = arith.constant 0 : i32
    return %arg1, %c0_i32, %c0_i32_0 : i32, i32, i32
  }
  func.func @transform_10(%arg0: i32, %arg1: i32) -> (i32, i32, i32) {
    %c0_i32 = arith.constant 0 : i32
    %c0_i32_0 = arith.constant 0 : i32
    %c0_i32_1 = arith.constant 0 : i32
    return %arg1, %c0_i32, %c0_i32_0 : i32, i32, i32
  }
  func.func @transform_11(%arg0: i32, %arg1: i32) -> (i32, i32, i32) {
    %c0_i32 = arith.constant 0 : i32
    %c0_i32_0 = arith.constant 0 : i32
    %c0_i32_1 = arith.constant 0 : i32
    return %arg1, %c0_i32, %c0_i32_0 : i32, i32, i32
  }
  func.func @transform_12(%arg0: i32, %arg1: i32) -> (i32, i32, i32) {
    %c0_i32 = arith.constant 0 : i32
    %c0_i32_0 = arith.constant 0 : i32
    %c0_i32_1 = arith.constant 0 : i32
    return %arg1, %c0_i32, %c0_i32_0 : i32, i32, i32
  }
  func.func @transform_13(%arg0: i32, %arg1: i32) -> (i32, i32, i32) {
    %c0_i32 = arith.constant 0 : i32
    %c0_i32_0 = arith.constant 0 : i32
    %c0_i32_1 = arith.constant 0 : i32
    return %arg1, %c0_i32, %c0_i32_0 : i32, i32, i32
  }
  func.func @transform_14(%arg0: i32, %arg1: i32) -> (i32, i32, i32) {
    %c0_i32 = arith.constant 0 : i32
    %c0_i32_0 = arith.constant 0 : i32
    %c0_i32_1 = arith.constant 0 : i32
    return %arg1, %c0_i32, %c0_i32_0 : i32, i32, i32
  }
  func.func @transform_15(%arg0: i32, %arg1: i32) -> (i32, i32, i32) {
    %c0_i32 = arith.constant 0 : i32
    %c0_i32_0 = arith.constant 0 : i32
    %c0_i32_1 = arith.constant 0 : i32
    return %arg1, %c0_i32, %c0_i32_0 : i32, i32, i32
  }
  func.func @transform_16(%arg0: i32, %arg1: i32) -> (i32, i32) {
    %c0_i32 = arith.constant 0 : i32
    %c0_i32_0 = arith.constant 0 : i32
    %c0_i32_1 = arith.constant 0 : i32
    return %c0_i32, %c0_i32_0 : i32, i32
  }
  func.func @transform_17(%arg0: i32, %arg1: i32) -> (i32, i32) {
    %c0_i32 = arith.constant 0 : i32
    %c0_i32_0 = arith.constant 0 : i32
    %c0_i32_1 = arith.constant 0 : i32
    return %c0_i32, %c0_i32_0 : i32, i32
  }
  func.func @transform_18(%arg0: i32, %arg1: i32) -> (i32, i32) {
    %c0_i32 = arith.constant 0 : i32
    %c0_i32_0 = arith.constant 0 : i32
    %c0_i32_1 = arith.constant 0 : i32
    return %c0_i32, %c0_i32_0 : i32, i32
  }
  func.func @transform_19(%arg0: i32, %arg1: i32) -> (i32, i32) {
    %c0_i32 = arith.constant 0 : i32
    %c0_i32_0 = arith.constant 0 : i32
    %c0_i32_1 = arith.constant 0 : i32
    return %c0_i32, %c0_i32_0 : i32, i32
  }
  func.func @transform_20(%arg0: i32, %arg1: i32) -> (i32, i32) {
    %c0_i32 = arith.constant 0 : i32
    %c0_i32_0 = arith.constant 0 : i32
    %c0_i32_1 = arith.constant 0 : i32
    return %c0_i32, %c0_i32_0 : i32, i32
  }
  func.func @transform_21(%arg0: i32, %arg1: i32) -> (i32, i32) {
    %c0_i32 = arith.constant 0 : i32
    %c0_i32_0 = arith.constant 0 : i32
    %c0_i32_1 = arith.constant 0 : i32
    return %c0_i32, %c0_i32_0 : i32, i32
  }
  func.func @transform_22(%arg0: i32, %arg1: i32) -> (i32, i32, i32) {
    %c0_i32 = arith.constant 0 : i32
    %c0_i32_0 = arith.constant 0 : i32
    %c0_i32_1 = arith.constant 0 : i32
    return %arg0, %c0_i32, %c0_i32_0 : i32, i32, i32
  }
  func.func @transform_23(%arg0: i32, %arg1: i32) -> (i32, i32, i32) {
    %c0_i32 = arith.constant 0 : i32
    %c0_i32_0 = arith.constant 0 : i32
    %c0_i32_1 = arith.constant 0 : i32
    return %arg0, %c0_i32, %c0_i32_0 : i32, i32, i32
  }
}

</mosaic_0001>

<llo_original>
// kernel: nlu_forward.1
$region0: #{nlu_forward.1}
  #allocation0 [shape = 'u32[]', space=smem, size = 0x4, offset = 0x4, fixed_abs, tag = 'smem constant byte address 0x4 - core index']
  #allocation1 [shape = 'u32[72,128]{1,0:T(1,128)}', space=vmem, size = 0x9000, scoped, tag = 'internal scratch']
  #allocation2 [shape = 'f32[8,128]{1,0:T(8,128)}', space=vmem, size = 0x1000, scoped, tag = 'scratch operand']
  %s0 = inlined_call_operand.vmem [shape: f32[2,8,128], index: 0, kind: input, shape index: {}]
  %s1 = inlined_call_operand.vmem [shape: f32[2,1,8], index: 1, kind: input, shape index: {}]
  %s2 = inlined_call_operand.vmem [shape: f32[1,128], index: 2, kind: input, shape index: {}]
  %s3 = inlined_call_operand.vmem [shape: f32[1,128], index: 3, kind: input, shape index: {}]
  %s4 = inlined_call_operand.hbm [shape: bf16[2,12,32,128], index: 4, kind: input, shape index: {}]
  %s5 = inlined_call_operand.vmem [shape: f32[2,12,1,32], index: 5, kind: input, shape index: {}]
  %s6 = inlined_call_operand.vmem [shape: bf16[2,4,32,128], index: 6, kind: input, shape index: {}]
  %s7 = inlined_call_operand.vmem [shape: f32[2,1,128], index: 7, kind: input, shape index: {}]
  %s8 = inlined_call_operand.vmem [shape: f32[2,1,128], index: 8, kind: input, shape index: {}]
  %s9 = inlined_call_operand.vmem [shape: f32[2,1,128], index: 9, kind: input, shape index: {}]
  %s10 = inlined_call_operand.hbm [shape: bf16[2,128,256], index: 10, kind: input, shape index: {}]
  %s11 = inlined_call_operand.vmem [shape: f32[2,1,256], index: 11, kind: input, shape index: {}]
  %s12 = inlined_call_operand.hbm [shape: bf16[2,256,128], index: 12, kind: input, shape index: {}]
  %s13 = inlined_call_operand.vmem [shape: f32[2,1,128], index: 13, kind: input, shape index: {}]
  %s14 = inlined_call_operand.vmem [shape: f32[2,1,128], index: 14, kind: input, shape index: {}]
  %s15 = inlined_call_operand.vmem [shape: f32[2,1,128], index: 15, kind: input, shape index: {}]
  %s16 = inlined_call_operand.vmem [shape: bf16[128,128], index: 16, kind: input, shape index: {}]
  %s17 = inlined_call_operand.vmem [shape: f32[1,128], index: 17, kind: input, shape index: {}]
  %s18 = inlined_call_operand.vmem [shape: bf16[128,128], index: 18, kind: input, shape index: {}]
  %s19 = inlined_call_operand.vmem [shape: f32[1,128], index: 19, kind: input, shape index: {}]
  %s20 = inlined_call_operand.hbm [shape: bf16[128,128], index: 20, kind: input, shape index: {}]
  %s21 = inlined_call_operand.vmem [shape: f32[1,128], index: 21, kind: input, shape index: {}]
  %s22 = inlined_call_operand.hbm [shape: f32[2,1,128], index: 22, kind: output, shape index: {0}]
  %s23 = inlined_call_operand.hbm [shape: f32[2,8,128], index: 23, kind: output, shape index: {1}]
  %24 = xla_tuple %s22, %s23
  %s25 = sld [smem:[#allocation0]]
  $region153: #{nlu_forward.1} parent=0
    _
  %s27 = ssub.s32 1, %s25
  %s28 = scalar_select 0, %s27, %s25
  $region1: #{nlu_forward.1} parent=0
    #allocation3 [shape = 'u8[196608]{0}', space=vmem, size = 0x30000, scoped, tag = 'input window, operand 4']
    #allocation4 [shape = 's32[2]{0}', space=sflag, size = 0x8, scoped, tag = 'scoped memory for nlu_forward.1']
    #allocation5 [shape = 's32[2]{0}', space=sflag, size = 0x8, scoped, tag = 'scoped memory for nlu_forward.1']
    #allocation6 [shape = 'u8[131072]{0}', space=vmem, size = 0x20000, scoped, tag = 'input window, operand 10']
    #allocation7 [shape = 's32[2]{0}', space=sflag, size = 0x8, scoped, tag = 'scoped memory for nlu_forward.1']
    #allocation8 [shape = 'u8[131072]{0}', space=vmem, size = 0x20000, scoped, tag = 'input window, operand 12']
    #allocation9 [shape = 'u8[32768]{0}', space=vmem, size = 0x8000, scoped, tag = 'input window, operand 20, single buffered']
    #allocation10 [shape = 's32[1]{0}', space=sflag, size = 0x4, scoped, tag = 'scoped memory for nlu_forward.1']
    #allocation11 [shape = 'u8[1024]{0}', space=vmem, size = 0x400, scoped, tag = 'output window, operand 0']
    #allocation12 [shape = 'u8[8192]{0}', space=vmem, size = 0x2000, scoped, tag = 'output window, operand 1']
    #allocation13 [shape = 's32[2]{0}', space=sflag, size = 0x8, scoped, tag = 'scoped memory for nlu_forward.1']
    %29 = vsyncpa [#allocation4], 0
    %s30 = scalar_lea.sflag [#allocation4], 1
    %31 = vsyncpa %s30, 0
    %32 = vsyncpa [#allocation7], 0
    %s33 = scalar_lea.sflag [#allocation7], 1
    %34 = vsyncpa %s33, 0
    %35 = vsyncpa [#allocation10], 0
    %36 = vsyncpa [#allocation5], 0
    %s37 = scalar_lea.sflag [#allocation5], 1
    %38 = vsyncpa %s37, 0
    %39 = vsyncpa [#allocation13], 0
    %s40 = scalar_lea.sflag [#allocation13], 1
    %41 = vsyncpa %s40, 0
    loop: start=0, step=1, limit=6
    $region2: #{nlu_forward.1} parent=1 // loop_pre_header
      _
    $region3: #{nlu_forward.1} parent=1 // loop_header
      %s43 = sphi 0, %s47
      %p44 = scmp.ge.s32.totalorder %s43, 6
      %s50 = sphi 0, %s62
      %s51 = sphi 0, %s58
      %s52 = sphi 0, %s50
      %s53 = sphi 0, %s51
      %s54 = sphi 0, %s52
      %s55 = sphi 0, %s53
      %s65 = sphi 0, %s67
      %s68 = sphi 0, %s65
      %s69 = sphi 0, %s68
      %s85 = sphi 0, %s69
      %s91 = sphi 0, %s93
      %s94 = sphi 0, %s91
      %s95 = sphi 0, %s94
      %s111 = sphi 0, %s95
      %s115 = sphi 0, %s115
      %s117 = sphi 0, %s115
      %s118 = sphi 0, %s117
      %s132 = sphi 0, %s118
      %s136 = sphi 0, %s136
      %s138 = sphi 0, %s136
      %s139 = sphi 0, %s138
      %s153 = sphi 0, %s139
      %s159 = sphi 0, %s161
      %s162 = sphi 0, %s159
      %s163 = sphi 0, %s162
      %s179 = sphi 0, %s163
      %s185 = sphi 0, %s187
      %s188 = sphi 0, %s185
      %s189 = sphi 0, %s188
      %s205 = sphi 0, %s189
      %s211 = sphi 0, %s213
      %s214 = sphi 0, %s211
      %s215 = sphi 0, %s214
      %s231 = sphi 0, %s215
      %s237 = sphi 0, %s239
      %s240 = sphi 0, %s237
      %s241 = sphi 0, %s240
      %s257 = sphi 0, %s241
      %s263 = sphi 0, %s265
      %s266 = sphi 0, %s263
      %s267 = sphi 0, %s266
      %s283 = sphi 0, %s267
      %s289 = sphi 0, %s291
      %s292 = sphi 0, %s289
      %s293 = sphi 0, %s292
      %s309 = sphi 0, %s293
      %s315 = sphi 0, %s317
      %s318 = sphi 0, %s315
      %s319 = sphi 0, %s318
      %s335 = sphi 0, %s319
      %s341 = sphi 0, %s343
      %s344 = sphi 0, %s341
      %s345 = sphi 0, %s344
      %s361 = sphi 0, %s345
      %s367 = sphi 0, %s369
      %s370 = sphi 0, %s367
      %s371 = sphi 0, %s370
      %s387 = sphi 0, %s371
      %s393 = sphi 0, %s395
      %s396 = sphi 0, %s393
      %s397 = sphi 0, %s396
      %s413 = sphi 0, %s397
      %s419 = sphi 0, %s421
      %s422 = sphi 0, %s419
      %s423 = sphi 0, %s422
      %s439 = sphi 0, %s423
      %s445 = sphi 0, %s447
      %s448 = sphi 0, %s445
      %s449 = sphi 0, %s448
      %s465 = sphi 0, %s449
      %s469 = sphi 0, %s469
      %s471 = sphi 0, %s469
      %s472 = sphi 0, %s471
      %s486 = sphi 0, %s472
      %s490 = sphi 0, %s490
      %s492 = sphi 0, %s490
      %s493 = sphi 0, %s492
      %s507 = sphi 0, %s493
      %s511 = sphi 0, %s511
      %s513 = sphi 0, %s511
      %s514 = sphi 0, %s513
      %s528 = sphi 0, %s514
      %s532 = sphi 0, %s532
      %s534 = sphi 0, %s532
      %s535 = sphi 0, %s534
      %s549 = sphi 0, %s535
      %s553 = sphi 0, %s553
      %s555 = sphi 0, %s553
      %s556 = sphi 0, %s555
      %s570 = sphi 0, %s556
      %s574 = sphi 0, %s574
      %s576 = sphi 0, %s574
      %s577 = sphi 0, %s576
      %s591 = sphi 0, %s577
      %s597 = sphi 0, %s599
      %s600 = sphi 0, %s597
      %s601 = sphi 0, %s600
      %s617 = sphi 0, %s601
      %s623 = sphi 0, %s625
      %s626 = sphi 0, %s623
      %s627 = sphi 0, %s626
      %s643 = sphi 0, %s627
    $region4: #{nlu_forward.1} parent=1 // loop_header_branch
      %46 = sbr.rel (%p44) target = $region8
    $region5: #{nlu_forward.1} parent=1 // loop_body
      %s48 = ssub.s32 %s43, 1
      %s49 = ssub.s32 %s43, 2
      %s56 = sadd.s32 1, %s51
      %p57 = scmp.ge.s32.totalorder %s56, 2
      %s58 = scalar_select %p57, 0, %s56
      %s59 = sadd.s32 1, %s50
      %s60 = scalar_select %p57, %s59, %s50
      %p61 = scmp.ge.s32.totalorder %s60, 2
      %s62 = scalar_select %p61, 0, %s60
      %s63 = ssub.s32 %s50, %s62
      %p64 = scmp.eq.s32.totalorder %s63, 0
      %s66 = sadd.s32 %s65, 1
      %s67 = scalar_select %p64, %s65, %s66
      %p70 = pneg %p64
      %p71 = scmp.eq.s32.totalorder %s43, 3
      %p72 = por %p70, %p71
      %p73 = scmp.ne.s32.totalorder %s65, %s68
      %p74 = scmp.eq.s32.totalorder %s43, 0
      %p75 = por %p73, %p74
      %p76 = scmp.ne.s32.totalorder %s65, %s68
      %p77 = scmp.eq.s32.totalorder %s48, 3
      %p78 = por %p76, %p77
      %p79 = scmp.ne.s32.totalorder %s68, %s69
      %p80 = scmp.eq.s32.totalorder %s48, 0
      %p81 = por %p79, %p80
      %p82 = scmp.ne.s32.totalorder %s68, %s69
      %p83 = scmp.eq.s32.totalorder %s49, 3
      %p84 = por %p82, %p83
      %p86 = scmp.ne.s32.totalorder %s69, %s85
      %p87 = scmp.eq.s32.totalorder %s49, 0
      %p88 = por %p86, %p87
      %s89 = ssub.s32 %s50, %s62
      %p90 = scmp.eq.s32.totalorder %s89, 0
      %s92 = sadd.s32 %s91, 1
      %s93 = scalar_select %p90, %s91, %s92
      %p96 = pneg %p90
      %p97 = scmp.eq.s32.totalorder %s43, 3
      %p98 = por %p96, %p97
      %p99 = scmp.ne.s32.totalorder %s91, %s94
      %p100 = scmp.eq.s32.totalorder %s43, 0
      %p101 = por %p99, %p100
      %p102 = scmp.ne.s32.totalorder %s91, %s94
      %p103 = scmp.eq.s32.totalorder %s48, 3
      %p104 = por %p102, %p103
      %p105 = scmp.ne.s32.totalorder %s94, %s95
      %p106 = scmp.eq.s32.totalorder %s48, 0
      %p107 = por %p105, %p106
      %p108 = scmp.ne.s32.totalorder %s94, %s95
      %p109 = scmp.eq.s32.totalorder %s49, 3
      %p110 = por %p108, %p109
      %p112 = scmp.ne.s32.totalorder %s95, %s111
      %p113 = scmp.eq.s32.totalorder %s49, 0
      %p114 = por %p112, %p113
      %s116 = sadd.s32 %s115, 1
      %p119 = scmp.eq.s32.totalorder %s43, 3
      %p120 = scmp.ne.s32.totalorder %s115, %s117
      %p121 = scmp.eq.s32.totalorder %s43, 0
      %p122 = por %p120, %p121
      %p123 = scmp.ne.s32.totalorder %s115, %s117
      %p124 = scmp.eq.s32.totalorder %s48, 3
      %p125 = por %p123, %p124
      %p126 = scmp.ne.s32.totalorder %s117, %s118
      %p127 = scmp.eq.s32.totalorder %s48, 0
      %p128 = por %p126, %p127
      %p129 = scmp.ne.s32.totalorder %s117, %s118
      %p130 = scmp.eq.s32.totalorder %s49, 3
      %p131 = por %p129, %p130
      %p133 = scmp.ne.s32.totalorder %s118, %s132
      %p134 = scmp.eq.s32.totalorder %s49, 0
      %p135 = por %p133, %p134
      %s137 = sadd.s32 %s136, 1
      %p140 = scmp.eq.s32.totalorder %s43, 3
      %p141 = scmp.ne.s32.totalorder %s136, %s138
      %p142 = scmp.eq.s32.totalorder %s43, 0
      %p143 = por %p141, %p142
      %p144 = scmp.ne.s32.totalorder %s136, %s138
      %p145 = scmp.eq.s32.totalorder %s48, 3
      %p146 = por %p144, %p145
      %p147 = scmp.ne.s32.totalorder %s138, %s139
      %p148 = scmp.eq.s32.totalorder %s48, 0
      %p149 = por %p147, %p148
      %p150 = scmp.ne.s32.totalorder %s138, %s139
      %p151 = scmp.eq.s32.totalorder %s49, 3
      %p152 = por %p150, %p151
      %p154 = scmp.ne.s32.totalorder %s139, %s153
      %p155 = scmp.eq.s32.totalorder %s49, 0
      %p156 = por %p154, %p155
      %s157 = ssub.s32 %s51, %s58
      %p158 = scmp.eq.s32.totalorder %s157, 0
      %s160 = sadd.s32 %s159, 1
      %s161 = scalar_select %p158, %s159, %s160
      %p164 = pneg %p158
      %p165 = scmp.eq.s32.totalorder %s43, 3
      %p166 = por %p164, %p165
      %p167 = scmp.ne.s32.totalorder %s159, %s162
      %p168 = scmp.eq.s32.totalorder %s43, 0
      %p169 = por %p167, %p168
      %p170 = scmp.ne.s32.totalorder %s159, %s162
      %p171 = scmp.eq.s32.totalorder %s48, 3
      %p172 = por %p170, %p171
      %p173 = scmp.ne.s32.totalorder %s162, %s163
      %p174 = scmp.eq.s32.totalorder %s48, 0
      %p175 = por %p173, %p174
      %p176 = scmp.ne.s32.totalorder %s162, %s163
      %p177 = scmp.eq.s32.totalorder %s49, 3
      %p178 = por %p176, %p177
      %p180 = scmp.ne.s32.totalorder %s163, %s179
      %p181 = scmp.eq.s32.totalorder %s49, 0
      %p182 = por %p180, %p181
      %s183 = ssub.s32 %s51, %s58
      %p184 = scmp.eq.s32.totalorder %s183, 0
      %s186 = sadd.s32 %s185, 1
      %s187 = scalar_select %p184, %s185, %s186
      %p190 = pneg %p184
      %p191 = scmp.eq.s32.totalorder %s43, 3
      %p192 = por %p190, %p191
      %p193 = scmp.ne.s32.totalorder %s185, %s188
      %p194 = scmp.eq.s32.totalorder %s43, 0
      %p195 = por %p193, %p194
      %p196 = scmp.ne.s32.totalorder %s185, %s188
      %p197 = scmp.eq.s32.totalorder %s48, 3
      %p198 = por %p196, %p197
      %p199 = scmp.ne.s32.totalorder %s188, %s189
      %p200 = scmp.eq.s32.totalorder %s48, 0
      %p201 = por %p199, %p200
      %p202 = scmp.ne.s32.totalorder %s188, %s189
      %p203 = scmp.eq.s32.totalorder %s49, 3
      %p204 = por %p202, %p203
      %p206 = scmp.ne.s32.totalorder %s189, %s205
      %p207 = scmp.eq.s32.totalorder %s49, 0
      %p208 = por %p206, %p207
      %s209 = ssub.s32 %s51, %s58
      %p210 = scmp.eq.s32.totalorder %s209, 0
      %s212 = sadd.s32 %s211, 1
      %s213 = scalar_select %p210, %s211, %s212
      %p216 = pneg %p210
      %p217 = scmp.eq.s32.totalorder %s43, 3
      %p218 = por %p216, %p217
      %p219 = scmp.ne.s32.totalorder %s211, %s214
      %p220 = scmp.eq.s32.totalorder %s43, 0
      %p221 = por %p219, %p220
      %p222 = scmp.ne.s32.totalorder %s211, %s214
      %p223 = scmp.eq.s32.totalorder %s48, 3
      %p224 = por %p222, %p223
      %p225 = scmp.ne.s32.totalorder %s214, %s215
      %p226 = scmp.eq.s32.totalorder %s48, 0
      %p227 = por %p225, %p226
      %p228 = scmp.ne.s32.totalorder %s214, %s215
      %p229 = scmp.eq.s32.totalorder %s49, 3
      %p230 = por %p228, %p229
      %p232 = scmp.ne.s32.totalorder %s215, %s231
      %p233 = scmp.eq.s32.totalorder %s49, 0
      %p234 = por %p232, %p233
      %s235 = ssub.s32 %s51, %s58
      %p236 = scmp.eq.s32.totalorder %s235, 0
      %s238 = sadd.s32 %s237, 1
      %s239 = scalar_select %p236, %s237, %s238
      %p242 = pneg %p236
      %p243 = scmp.eq.s32.totalorder %s43, 3
      %p244 = por %p242, %p243
      %p245 = scmp.ne.s32.totalorder %s237, %s240
      %p246 = scmp.eq.s32.totalorder %s43, 0
      %p247 = por %p245, %p246
      %p248 = scmp.ne.s32.totalorder %s237, %s240
      %p249 = scmp.eq.s32.totalorder %s48, 3
      %p250 = por %p248, %p249
      %p251 = scmp.ne.s32.totalorder %s240, %s241
      %p252 = scmp.eq.s32.totalorder %s48, 0
      %p253 = por %p251, %p252
      %p254 = scmp.ne.s32.totalorder %s240, %s241
      %p255 = scmp.eq.s32.totalorder %s49, 3
      %p256 = por %p254, %p255
      %p258 = scmp.ne.s32.totalorder %s241, %s257
      %p259 = scmp.eq.s32.totalorder %s49, 0
      %p260 = por %p258, %p259
      %s261 = ssub.s32 %s51, %s58
      %p262 = scmp.eq.s32.totalorder %s261, 0
      %s264 = sadd.s32 %s263, 1
      %s265 = scalar_select %p262, %s263, %s264
      %p268 = pneg %p262
      %p269 = scmp.eq.s32.totalorder %s43, 3
      %p270 = por %p268, %p269
      %p271 = scmp.ne.s32.totalorder %s263, %s266
      %p272 = scmp.eq.s32.totalorder %s43, 0
      %p273 = por %p271, %p272
      %p274 = scmp.ne.s32.totalorder %s263, %s266
      %p275 = scmp.eq.s32.totalorder %s48, 3
      %p276 = por %p274, %p275
      %p277 = scmp.ne.s32.totalorder %s266, %s267
      %p278 = scmp.eq.s32.totalorder %s48, 0
      %p279 = por %p277, %p278
      %p280 = scmp.ne.s32.totalorder %s266, %s267
      %p281 = scmp.eq.s32.totalorder %s49, 3
      %p282 = por %p280, %p281
      %p284 = scmp.ne.s32.totalorder %s267, %s283
      %p285 = scmp.eq.s32.totalorder %s49, 0
      %p286 = por %p284, %p285
      %s287 = ssub.s32 %s51, %s58
      %p288 = scmp.eq.s32.totalorder %s287, 0
      %s290 = sadd.s32 %s289, 1
      %s291 = scalar_select %p288, %s289, %s290
      %p294 = pneg %p288
      %p295 = scmp.eq.s32.totalorder %s43, 3
      %p296 = por %p294, %p295
      %p297 = scmp.ne.s32.totalorder %s289, %s292
      %p298 = scmp.eq.s32.totalorder %s43, 0
      %p299 = por %p297, %p298
      %p300 = scmp.ne.s32.totalorder %s289, %s292
      %p301 = scmp.eq.s32.totalorder %s48, 3
      %p302 = por %p300, %p301
      %p303 = scmp.ne.s32.totalorder %s292, %s293
      %p304 = scmp.eq.s32.totalorder %s48, 0
      %p305 = por %p303, %p304
      %p306 = scmp.ne.s32.totalorder %s292, %s293
      %p307 = scmp.eq.s32.totalorder %s49, 3
      %p308 = por %p306, %p307
      %p310 = scmp.ne.s32.totalorder %s293, %s309
      %p311 = scmp.eq.s32.totalorder %s49, 0
      %p312 = por %p310, %p311
      %s313 = ssub.s32 %s51, %s58
      %p314 = scmp.eq.s32.totalorder %s313, 0
      %s316 = sadd.s32 %s315, 1
      %s317 = scalar_select %p314, %s315, %s316
      %p320 = pneg %p314
      %p321 = scmp.eq.s32.totalorder %s43, 3
      %p322 = por %p320, %p321
      %p323 = scmp.ne.s32.totalorder %s315, %s318
      %p324 = scmp.eq.s32.totalorder %s43, 0
      %p325 = por %p323, %p324
      %p326 = scmp.ne.s32.totalorder %s315, %s318
      %p327 = scmp.eq.s32.totalorder %s48, 3
      %p328 = por %p326, %p327
      %p329 = scmp.ne.s32.totalorder %s318, %s319
      %p330 = scmp.eq.s32.totalorder %s48, 0
      %p331 = por %p329, %p330
      %p332 = scmp.ne.s32.totalorder %s318, %s319
      %p333 = scmp.eq.s32.totalorder %s49, 3
      %p334 = por %p332, %p333
      %p336 = scmp.ne.s32.totalorder %s319, %s335
      %p337 = scmp.eq.s32.totalorder %s49, 0
      %p338 = por %p336, %p337
      %s339 = ssub.s32 %s51, %s58
      %p340 = scmp.eq.s32.totalorder %s339, 0
      %s342 = sadd.s32 %s341, 1
      %s343 = scalar_select %p340, %s341, %s342
      %p346 = pneg %p340
      %p347 = scmp.eq.s32.totalorder %s43, 3
      %p348 = por %p346, %p347
      %p349 = scmp.ne.s32.totalorder %s341, %s344
      %p350 = scmp.eq.s32.totalorder %s43, 0
      %p351 = por %p349, %p350
      %p352 = scmp.ne.s32.totalorder %s341, %s344
      %p353 = scmp.eq.s32.totalorder %s48, 3
      %p354 = por %p352, %p353
      %p355 = scmp.ne.s32.totalorder %s344, %s345
      %p356 = scmp.eq.s32.totalorder %s48, 0
      %p357 = por %p355, %p356
      %p358 = scmp.ne.s32.totalorder %s344, %s345
      %p359 = scmp.eq.s32.totalorder %s49, 3
      %p360 = por %p358, %p359
      %p362 = scmp.ne.s32.totalorder %s345, %s361
      %p363 = scmp.eq.s32.totalorder %s49, 0
      %p364 = por %p362, %p363
      %s365 = ssub.s32 %s51, %s58
      %p366 = scmp.eq.s32.totalorder %s365, 0
      %s368 = sadd.s32 %s367, 1
      %s369 = scalar_select %p366, %s367, %s368
      %p372 = pneg %p366
      %p373 = scmp.eq.s32.totalorder %s43, 3
      %p374 = por %p372, %p373
      %p375 = scmp.ne.s32.totalorder %s367, %s370
      %p376 = scmp.eq.s32.totalorder %s43, 0
      %p377 = por %p375, %p376
      %p378 = scmp.ne.s32.totalorder %s367, %s370
      %p379 = scmp.eq.s32.totalorder %s48, 3
      %p380 = por %p378, %p379
      %p381 = scmp.ne.s32.totalorder %s370, %s371
      %p382 = scmp.eq.s32.totalorder %s48, 0
      %p383 = por %p381, %p382
      %p384 = scmp.ne.s32.totalorder %s370, %s371
      %p385 = scmp.eq.s32.totalorder %s49, 3
      %p386 = por %p384, %p385
      %p388 = scmp.ne.s32.totalorder %s371, %s387
      %p389 = scmp.eq.s32.totalorder %s49, 0
      %p390 = por %p388, %p389
      %s391 = ssub.s32 %s51, %s58
      %p392 = scmp.eq.s32.totalorder %s391, 0
      %s394 = sadd.s32 %s393, 1
      %s395 = scalar_select %p392, %s393, %s394
      %p398 = pneg %p392
      %p399 = scmp.eq.s32.totalorder %s43, 3
      %p400 = por %p398, %p399
      %p401 = scmp.ne.s32.totalorder %s393, %s396
      %p402 = scmp.eq.s32.totalorder %s43, 0
      %p403 = por %p401, %p402
      %p404 = scmp.ne.s32.totalorder %s393, %s396
      %p405 = scmp.eq.s32.totalorder %s48, 3
      %p406 = por %p404, %p405
      %p407 = scmp.ne.s32.totalorder %s396, %s397
      %p408 = scmp.eq.s32.totalorder %s48, 0
      %p409 = por %p407, %p408
      %p410 = scmp.ne.s32.totalorder %s396, %s397
      %p411 = scmp.eq.s32.totalorder %s49, 3
      %p412 = por %p410, %p411
      %p414 = scmp.ne.s32.totalorder %s397, %s413
      %p415 = scmp.eq.s32.totalorder %s49, 0
      %p416 = por %p414, %p415
      %s417 = ssub.s32 %s51, %s58
      %p418 = scmp.eq.s32.totalorder %s417, 0
      %s420 = sadd.s32 %s419, 1
      %s421 = scalar_select %p418, %s419, %s420
      %p424 = pneg %p418
      %p425 = scmp.eq.s32.totalorder %s43, 3
      %p426 = por %p424, %p425
      %p427 = scmp.ne.s32.totalorder %s419, %s422
      %p428 = scmp.eq.s32.totalorder %s43, 0
      %p429 = por %p427, %p428
      %p430 = scmp.ne.s32.totalorder %s419, %s422
      %p431 = scmp.eq.s32.totalorder %s48, 3
      %p432 = por %p430, %p431
      %p433 = scmp.ne.s32.totalorder %s422, %s423
      %p434 = scmp.eq.s32.totalorder %s48, 0
      %p435 = por %p433, %p434
      %p436 = scmp.ne.s32.totalorder %s422, %s423
      %p437 = scmp.eq.s32.totalorder %s49, 3
      %p438 = por %p436, %p437
      %p440 = scmp.ne.s32.totalorder %s423, %s439
      %p441 = scmp.eq.s32.totalorder %s49, 0
      %p442 = por %p440, %p441
      %s443 = ssub.s32 %s51, %s58
      %p444 = scmp.eq.s32.totalorder %s443, 0
      %s446 = sadd.s32 %s445, 1
      %s447 = scalar_select %p444, %s445, %s446
      %p450 = pneg %p444
      %p451 = scmp.eq.s32.totalorder %s43, 3
      %p452 = por %p450, %p451
      %p453 = scmp.ne.s32.totalorder %s445, %s448
      %p454 = scmp.eq.s32.totalorder %s43, 0
      %p455 = por %p453, %p454
      %p456 = scmp.ne.s32.totalorder %s445, %s448
      %p457 = scmp.eq.s32.totalorder %s48, 3
      %p458 = por %p456, %p457
      %p459 = scmp.ne.s32.totalorder %s448, %s449
      %p460 = scmp.eq.s32.totalorder %s48, 0
      %p461 = por %p459, %p460
      %p462 = scmp.ne.s32.totalorder %s448, %s449
      %p463 = scmp.eq.s32.totalorder %s49, 3
      %p464 = por %p462, %p463
      %p466 = scmp.ne.s32.totalorder %s449, %s465
      %p467 = scmp.eq.s32.totalorder %s49, 0
      %p468 = por %p466, %p467
      %s470 = sadd.s32 %s469, 1
      %p473 = scmp.eq.s32.totalorder %s43, 3
      %p474 = scmp.ne.s32.totalorder %s469, %s471
      %p475 = scmp.eq.s32.totalorder %s43, 0
      %p476 = por %p474, %p475
      %p477 = scmp.ne.s32.totalorder %s469, %s471
      %p478 = scmp.eq.s32.totalorder %s48, 3
      %p479 = por %p477, %p478
      %p480 = scmp.ne.s32.totalorder %s471, %s472
      %p481 = scmp.eq.s32.totalorder %s48, 0
      %p482 = por %p480, %p481
      %p483 = scmp.ne.s32.totalorder %s471, %s472
      %p484 = scmp.eq.s32.totalorder %s49, 3
      %p485 = por %p483, %p484
      %p487 = scmp.ne.s32.totalorder %s472, %s486
      %p488 = scmp.eq.s32.totalorder %s49, 0
      %p489 = por %p487, %p488
      %s491 = sadd.s32 %s490, 1
      %p494 = scmp.eq.s32.totalorder %s43, 3
      %p495 = scmp.ne.s32.totalorder %s490, %s492
      %p496 = scmp.eq.s32.totalorder %s43, 0
      %p497 = por %p495, %p496
      %p498 = scmp.ne.s32.totalorder %s490, %s492
      %p499 = scmp.eq.s32.totalorder %s48, 3
      %p500 = por %p498, %p499
      %p501 = scmp.ne.s32.totalorder %s492, %s493
      %p502 = scmp.eq.s32.totalorder %s48, 0
      %p503 = por %p501, %p502
      %p504 = scmp.ne.s32.totalorder %s492, %s493
      %p505 = scmp.eq.s32.totalorder %s49, 3
      %p506 = por %p504, %p505
      %p508 = scmp.ne.s32.totalorder %s493, %s507
      %p509 = scmp.eq.s32.totalorder %s49, 0
      %p510 = por %p508, %p509
      %s512 = sadd.s32 %s511, 1
      %p515 = scmp.eq.s32.totalorder %s43, 3
      %p516 = scmp.ne.s32.totalorder %s511, %s513
      %p517 = scmp.eq.s32.totalorder %s43, 0
      %p518 = por %p516, %p517
      %p519 = scmp.ne.s32.totalorder %s511, %s513
      %p520 = scmp.eq.s32.totalorder %s48, 3
      %p521 = por %p519, %p520
      %p522 = scmp.ne.s32.totalorder %s513, %s514
      %p523 = scmp.eq.s32.totalorder %s48, 0
      %p524 = por %p522, %p523
      %p525 = scmp.ne.s32.totalorder %s513, %s514
      %p526 = scmp.eq.s32.totalorder %s49, 3
      %p527 = por %p525, %p526
      %p529 = scmp.ne.s32.totalorder %s514, %s528
      %p530 = scmp.eq.s32.totalorder %s49, 0
      %p531 = por %p529, %p530
      %s533 = sadd.s32 %s532, 1
      %p536 = scmp.eq.s32.totalorder %s43, 3
      %p537 = scmp.ne.s32.totalorder %s532, %s534
      %p538 = scmp.eq.s32.totalorder %s43, 0
      %p539 = por %p537, %p538
      %p540 = scmp.ne.s32.totalorder %s532, %s534
      %p541 = scmp.eq.s32.totalorder %s48, 3
      %p542 = por %p540, %p541
      %p543 = scmp.ne.s32.totalorder %s534, %s535
      %p544 = scmp.eq.s32.totalorder %s48, 0
      %p545 = por %p543, %p544
      %p546 = scmp.ne.s32.totalorder %s534, %s535
      %p547 = scmp.eq.s32.totalorder %s49, 3
      %p548 = por %p546, %p547
      %p550 = scmp.ne.s32.totalorder %s535, %s549
      %p551 = scmp.eq.s32.totalorder %s49, 0
      %p552 = por %p550, %p551
      %s554 = sadd.s32 %s553, 1
      %p557 = scmp.eq.s32.totalorder %s43, 3
      %p558 = scmp.ne.s32.totalorder %s553, %s555
      %p559 = scmp.eq.s32.totalorder %s43, 0
      %p560 = por %p558, %p559
      %p561 = scmp.ne.s32.totalorder %s553, %s555
      %p562 = scmp.eq.s32.totalorder %s48, 3
      %p563 = por %p561, %p562
      %p564 = scmp.ne.s32.totalorder %s555, %s556
      %p565 = scmp.eq.s32.totalorder %s48, 0
      %p566 = por %p564, %p565
      %p567 = scmp.ne.s32.totalorder %s555, %s556
      %p568 = scmp.eq.s32.totalorder %s49, 3
      %p569 = por %p567, %p568
      %p571 = scmp.ne.s32.totalorder %s556, %s570
      %p572 = scmp.eq.s32.totalorder %s49, 0
      %p573 = por %p571, %p572
      %s575 = sadd.s32 %s574, 1
      %p578 = scmp.eq.s32.totalorder %s43, 3
      %p579 = scmp.ne.s32.totalorder %s574, %s576
      %p580 = scmp.eq.s32.totalorder %s43, 0
      %p581 = por %p579, %p580
      %p582 = scmp.ne.s32.totalorder %s574, %s576
      %p583 = scmp.eq.s32.totalorder %s48, 3
      %p584 = por %p582, %p583
      %p585 = scmp.ne.s32.totalorder %s576, %s577
      %p586 = scmp.eq.s32.totalorder %s48, 0
      %p587 = por %p585, %p586
      %p588 = scmp.ne.s32.totalorder %s576, %s577
      %p589 = scmp.eq.s32.totalorder %s49, 3
      %p590 = por %p588, %p589
      %p592 = scmp.ne.s32.totalorder %s577, %s591
      %p593 = scmp.eq.s32.totalorder %s49, 0
      %p594 = por %p592, %p593
      %s595 = ssub.s32 %s50, %s62
      %p596 = scmp.eq.s32.totalorder %s595, 0
      %s598 = sadd.s32 %s597, 1
      %s599 = scalar_select %p596, %s597, %s598
      %p602 = pneg %p596
      %p603 = scmp.eq.s32.totalorder %s43, 3
      %p604 = por %p602, %p603
      %p605 = scmp.ne.s32.totalorder %s597, %s600
      %p606 = scmp.eq.s32.totalorder %s43, 0
      %p607 = por %p605, %p606
      %p608 = scmp.ne.s32.totalorder %s597, %s600
      %p609 = scmp.eq.s32.totalorder %s48, 3
      %p610 = por %p608, %p609
      %p611 = scmp.ne.s32.totalorder %s600, %s601
      %p612 = scmp.eq.s32.totalorder %s48, 0
      %p613 = por %p611, %p612
      %p614 = scmp.ne.s32.totalorder %s600, %s601
      %p615 = scmp.eq.s32.totalorder %s49, 3
      %p616 = por %p614, %p615
      %p618 = scmp.ne.s32.totalorder %s601, %s617
      %p619 = scmp.eq.s32.totalorder %s49, 0
      %p620 = por %p618, %p619
      %s621 = ssub.s32 %s50, %s62
      %p622 = scmp.eq.s32.totalorder %s621, 0
      %s624 = sadd.s32 %s623, 1
      %s625 = scalar_select %p622, %s623, %s624
      %p628 = pneg %p622
      %p629 = scmp.eq.s32.totalorder %s43, 3
      %p630 = por %p628, %p629
      %p631 = scmp.ne.s32.totalorder %s623, %s626
      %p632 = scmp.eq.s32.totalorder %s43, 0
      %p633 = por %p631, %p632
      %p634 = scmp.ne.s32.totalorder %s623, %s626
      %p635 = scmp.eq.s32.totalorder %s48, 3
      %p636 = por %p634, %p635
      %p637 = scmp.ne.s32.totalorder %s626, %s627
      %p638 = scmp.eq.s32.totalorder %s48, 0
      %p639 = por %p637, %p638
      %p640 = scmp.ne.s32.totalorder %s626, %s627
      %p641 = scmp.eq.s32.totalorder %s49, 3
      %p642 = por %p640, %p641
      %p644 = scmp.ne.s32.totalorder %s627, %s643
      %p645 = scmp.eq.s32.totalorder %s49, 0
      %p646 = por %p644, %p645
      %p647 = scmp.le.s32.totalorder 1, %s43
      %p648 = scmp.lt.s32.totalorder %s43, 5
      %p649 = pnand %p647, %p648
      %p650 = pneg %p649
      // Predicated region
      $region9: #{nlu_forward.1} parent=5 // pred_check
        _
      $region10: #{nlu_forward.1} parent=5 // pred_check_branch
        %652 = sbr.rel (%p649) target = $region12
      $region11: #{nlu_forward.1} parent=5 // pred_region
        %s653 = ssub.s32 %s43, 1
        // Predicated region
        $region13: #{nlu_forward.1} parent=11 // pred_check
          %p654 = pneg %p128
        $region14: #{nlu_forward.1} parent=11 // pred_check_branch
          %656 = sbr.rel (%p654) target = $region16
        $region15: #{nlu_forward.1} parent=11 // pred_region
          _
        $region16: #{nlu_forward.1} parent=11 // pred_fallthru
          _
        // Predicated region
        $region17: #{nlu_forward.1} parent=11 // pred_check
          %p657 = pneg %p149
        $region18: #{nlu_forward.1} parent=11 // pred_check_branch
          %659 = sbr.rel (%p657) target = $region20
        $region19: #{nlu_forward.1} parent=11 // pred_region
          _
        $region20: #{nlu_forward.1} parent=11 // pred_fallthru
          _
        // Predicated region
        $region21: #{nlu_forward.1} parent=11 // pred_check
          %p660 = pneg %p482
        $region22: #{nlu_forward.1} parent=11 // pred_check_branch
          %662 = sbr.rel (%p660) target = $region24
        $region23: #{nlu_forward.1} parent=11 // pred_region
          _
        $region24: #{nlu_forward.1} parent=11 // pred_fallthru
          _
        // Predicated region
        $region25: #{nlu_forward.1} parent=11 // pred_check
          %p663 = pneg %p503
        $region26: #{nlu_forward.1} parent=11 // pred_check_branch
          %665 = sbr.rel (%p663) target = $region28
        $region27: #{nlu_forward.1} parent=11 // pred_region
          _
        $region28: #{nlu_forward.1} parent=11 // pred_fallthru
          _
        // Predicated region
        $region29: #{nlu_forward.1} parent=11 // pred_check
          %p666 = pneg %p524
        $region30: #{nlu_forward.1} parent=11 // pred_check_branch
          %668 = sbr.rel (%p666) target = $region32
        $region31: #{nlu_forward.1} parent=11 // pred_region
          _
        $region32: #{nlu_forward.1} parent=11 // pred_fallthru
          _
        // Predicated region
        $region33: #{nlu_forward.1} parent=11 // pred_check
          %p669 = pneg %p545
        $region34: #{nlu_forward.1} parent=11 // pred_check_branch
          %671 = sbr.rel (%p669) target = $region36
        $region35: #{nlu_forward.1} parent=11 // pred_region
          _
        $region36: #{nlu_forward.1} parent=11 // pred_fallthru
          _
        // Predicated region
        $region37: #{nlu_forward.1} parent=11 // pred_check
          %p672 = pneg %p566
        $region38: #{nlu_forward.1} parent=11 // pred_check_branch
          %674 = sbr.rel (%p672) target = $region40
        $region39: #{nlu_forward.1} parent=11 // pred_region
          %676 = vsyncadd [#allocation10], 0
          %s677 = sshll.u32 %s20, 4
          %s678 = int_to_ptr.hbm [resolvable:$true] %s677
          %s679 = sshll.u32 [#allocation9], 4
          %s680 = int_to_ptr.vmem [resolvable:$true] %s679
          %685 = dma.hbm_to_vmem [thread:$0]  %s678, 1024, %s680, [#allocation10], 64, 64, 4
        $region40: #{nlu_forward.1} parent=11 // pred_fallthru
          _
        // Predicated region
        $region41: #{nlu_forward.1} parent=11 // pred_check
          %p686 = pneg %p587
        $region42: #{nlu_forward.1} parent=11 // pred_check_branch
          %688 = sbr.rel (%p686) target = $region44
        $region43: #{nlu_forward.1} parent=11 // pred_region
          _
        $region44: #{nlu_forward.1} parent=11 // pred_fallthru
          _
      $region12: #{nlu_forward.1} parent=5 // pred_fallthru
        _
      %p689 = scmp.lt.s32.totalorder %s43, 4
      // Predicated region
      $region45: #{nlu_forward.1} parent=5 // pred_check
        %p690 = pneg %p689
      $region46: #{nlu_forward.1} parent=5 // pred_check_branch
        %692 = sbr.rel (%p690) target = $region48
      $region47: #{nlu_forward.1} parent=5 // pred_region
        // Predicated region
        $region49: #{nlu_forward.1} parent=47 // pred_check
          %p693 = pneg %p75
        $region50: #{nlu_forward.1} parent=47 // pred_check_branch
          %695 = sbr.rel (%p693) target = $region52
        $region51: #{nlu_forward.1} parent=47 // pred_region
          %p696 = scmp.lt.s32.totalorder %s50, 1
          %s697 = scalar_select %p696, %s50, 1
          %s698 = smul.addr %s697, 8
          %s699 = scalar_lea.vmem %s0, %s698
        $region52: #{nlu_forward.1} parent=47 // pred_fallthru
          _
        // Predicated region
        $region53: #{nlu_forward.1} parent=47 // pred_check
          %p700 = pneg %p101
        $region54: #{nlu_forward.1} parent=47 // pred_check_branch
          %702 = sbr.rel (%p700) target = $region56
        $region55: #{nlu_forward.1} parent=47 // pred_region
          %p703 = scmp.lt.s32.totalorder %s50, 1
          %s704 = scalar_select %p703, %s50, 1
          %s705 = scalar_lea.vmem %s1, %s704
        $region56: #{nlu_forward.1} parent=47 // pred_fallthru
          _
        // Predicated region
        $region57: #{nlu_forward.1} parent=47 // pred_check
          %p706 = pneg %p169
        $region58: #{nlu_forward.1} parent=47 // pred_check_branch
          %708 = sbr.rel (%p706) target = $region60
        $region59: #{nlu_forward.1} parent=47 // pred_region
          %s709 = sand.u32 %s159, 1
          %s710 = scalar_lea.sflag [#allocation4], %s709
          %s711 = sand.u32 %s159, 1
          %s712 = smul.addr %s711, 192
          %s713 = scalar_lea.vmem [#allocation3], %s712
          %715 = vsyncadd %s710, 0
          %s716 = smul.addr %s51, 48
          %s717 = smul.addr %s716, 4
          %s718 = scalar_lea.hbm %s4, %s717
          %s719 = sshll.u32 %s718, 4
          %s720 = int_to_ptr.hbm [resolvable:$true] %s719
          %s721 = sshll.u32 %s713, 4
          %s722 = int_to_ptr.vmem [resolvable:$true] %s721
          %727 = dma.hbm_to_vmem [thread:$0]  %s720, 3072, %s722, %s710, 64, 64, 4
        $region60: #{nlu_forward.1} parent=47 // pred_fallthru
          _
        // Predicated region
        $region61: #{nlu_forward.1} parent=47 // pred_check
          %p728 = pneg %p195
        $region62: #{nlu_forward.1} parent=47 // pred_check_branch
          %730 = sbr.rel (%p728) target = $region64
        $region63: #{nlu_forward.1} parent=47 // pred_region
          %p731 = scmp.lt.s32.totalorder %s51, 1
          %s732 = scalar_select %p731, %s51, 1
          %s733 = smul.addr %s732, 12
          %s734 = scalar_lea.vmem %s5, %s733
        $region64: #{nlu_forward.1} parent=47 // pred_fallthru
          _
        // Predicated region
        $region65: #{nlu_forward.1} parent=47 // pred_check
          %p735 = pneg %p221
        $region66: #{nlu_forward.1} parent=47 // pred_check_branch
          %737 = sbr.rel (%p735) target = $region68
        $region67: #{nlu_forward.1} parent=47 // pred_region
          %p738 = scmp.lt.s32.totalorder %s51, 1
          %s739 = scalar_select %p738, %s51, 1
          %s740 = smul.addr %s739, 16
          %s741 = smul.addr %s740, 4
          %s742 = scalar_lea.vmem %s6, %s741
        $region68: #{nlu_forward.1} parent=47 // pred_fallthru
          _
        // Predicated region
        $region69: #{nlu_forward.1} parent=47 // pred_check
          %p743 = pneg %p247
        $region70: #{nlu_forward.1} parent=47 // pred_check_branch
          %745 = sbr.rel (%p743) target = $region72
        $region71: #{nlu_forward.1} parent=47 // pred_region
          %p746 = scmp.lt.s32.totalorder %s51, 1
          %s747 = scalar_select %p746, %s51, 1
          %s748 = scalar_lea.vmem %s7, %s747
        $region72: #{nlu_forward.1} parent=47 // pred_fallthru
          _
        // Predicated region
        $region73: #{nlu_forward.1} parent=47 // pred_check
          %p749 = pneg %p273
        $region74: #{nlu_forward.1} parent=47 // pred_check_branch
          %751 = sbr.rel (%p749) target = $region76
        $region75: #{nlu_forward.1} parent=47 // pred_region
          %p752 = scmp.lt.s32.totalorder %s51, 1
          %s753 = scalar_select %p752, %s51, 1
          %s754 = scalar_lea.vmem %s8, %s753
        $region76: #{nlu_forward.1} parent=47 // pred_fallthru
          _
        // Predicated region
        $region77: #{nlu_forward.1} parent=47 // pred_check
          %p755 = pneg %p299
        $region78: #{nlu_forward.1} parent=47 // pred_check_branch
          %757 = sbr.rel (%p755) target = $region80
        $region79: #{nlu_forward.1} parent=47 // pred_region
          %p758 = scmp.lt.s32.totalorder %s51, 1
          %s759 = scalar_select %p758, %s51, 1
          %s760 = scalar_lea.vmem %s9, %s759
        $region80: #{nlu_forward.1} parent=47 // pred_fallthru
          _
        // Predicated region
        $region81: #{nlu_forward.1} parent=47 // pred_check
          %p761 = pneg %p325
        $region82: #{nlu_forward.1} parent=47 // pred_check_branch
          %763 = sbr.rel (%p761) target = $region84
        $region83: #{nlu_forward.1} parent=47 // pred_region
          %s764 = sand.u32 %s43, 1
          %s765 = scalar_lea.sflag [#allocation7], %s764
          %s766 = sand.u32 %s315, 1
          %s767 = smul.addr %s766, 128
          %s768 = scalar_lea.vmem [#allocation6], %s767
          %770 = vsyncadd %s765, 0
          %s771 = smul.addr %s51, 32
          %s772 = smul.addr %s771, 4
          %s773 = scalar_lea.hbm %s10, %s772
          %s774 = sshll.u32 %s773, 4
          %s775 = int_to_ptr.hbm [resolvable:$true] %s774
          %s776 = sshll.u32 %s768, 4
          %s777 = int_to_ptr.vmem [resolvable:$true] %s776
          %782 = dma.hbm_to_vmem [thread:$0]  %s775, 2048, %s777, %s765, 128, 128, 8
        $region84: #{nlu_forward.1} parent=47 // pred_fallthru
          _
        // Predicated region
        $region85: #{nlu_forward.1} parent=47 // pred_check
          %p783 = pneg %p351
        $region86: #{nlu_forward.1} parent=47 // pred_check_branch
          %785 = sbr.rel (%p783) target = $region88
        $region87: #{nlu_forward.1} parent=47 // pred_region
          %p786 = scmp.lt.s32.totalorder %s51, 1
          %s787 = scalar_select %p786, %s51, 1
          %s788 = smul.addr %s787, 2
          %s789 = scalar_lea.vmem %s11, %s788
        $region88: #{nlu_forward.1} parent=47 // pred_fallthru
          _
        // Predicated region
        $region89: #{nlu_forward.1} parent=47 // pred_check
          %p790 = pneg %p377
        $region90: #{nlu_forward.1} parent=47 // pred_check_branch
          %792 = sbr.rel (%p790) target = $region92
        $region91: #{nlu_forward.1} parent=47 // pred_region
          %s793 = sand.u32 %s43, 1
          %s794 = scalar_lea.sflag [#allocation7], %s793
          %s795 = sand.u32 %s367, 1
          %s796 = smul.addr %s795, 128
          %s797 = scalar_lea.vmem [#allocation8], %s796
          %799 = vsyncadd %s794, 0
          %s800 = smul.addr %s51, 32
          %s801 = smul.addr %s800, 4
          %s802 = scalar_lea.hbm %s12, %s801
          %s803 = sshll.u32 %s802, 4
          %s804 = int_to_ptr.hbm [resolvable:$true] %s803
          %s805 = sshll.u32 %s797, 4
          %s806 = int_to_ptr.vmem [resolvable:$true] %s805
          %811 = dma.hbm_to_vmem [thread:$0]  %s804, 2048, %s806, %s794, 64, 64, 4
        $region92: #{nlu_forward.1} parent=47 // pred_fallthru
          _
        // Predicated region
        $region93: #{nlu_forward.1} parent=47 // pred_check
          %p812 = pneg %p403
        $region94: #{nlu_forward.1} parent=47 // pred_check_branch
          %814 = sbr.rel (%p812) target = $region96
        $region95: #{nlu_forward.1} parent=47 // pred_region
          %p815 = scmp.lt.s32.totalorder %s51, 1
          %s816 = scalar_select %p815, %s51, 1
          %s817 = scalar_lea.vmem %s13, %s816
        $region96: #{nlu_forward.1} parent=47 // pred_fallthru
          _
        // Predicated region
        $region97: #{nlu_forward.1} parent=47 // pred_check
          %p818 = pneg %p429
        $region98: #{nlu_forward.1} parent=47 // pred_check_branch
          %820 = sbr.rel (%p818) target = $region100
        $region99: #{nlu_forward.1} parent=47 // pred_region
          %p821 = scmp.lt.s32.totalorder %s51, 1
          %s822 = scalar_select %p821, %s51, 1
          %s823 = scalar_lea.vmem %s14, %s822
        $region100: #{nlu_forward.1} parent=47 // pred_fallthru
          _
        // Predicated region
        $region101: #{nlu_forward.1} parent=47 // pred_check
          %p824 = pneg %p455
        $region102: #{nlu_forward.1} parent=47 // pred_check_branch
          %826 = sbr.rel (%p824) target = $region104
        $region103: #{nlu_forward.1} parent=47 // pred_region
          %p827 = scmp.lt.s32.totalorder %s51, 1
          %s828 = scalar_select %p827, %s51, 1
          %s829 = scalar_lea.vmem %s15, %s828
        $region104: #{nlu_forward.1} parent=47 // pred_fallthru
          _
      $region48: #{nlu_forward.1} parent=5 // pred_fallthru
        _
      %p830 = scmp.le.s32.totalorder 1, %s43
      %p831 = scmp.lt.s32.totalorder %s43, 5
      %p832 = pnand %p830, %p831
      %p833 = pneg %p832
      // Predicated region
      $region105: #{nlu_forward.1} parent=5 // pred_check
        _
      $region106: #{nlu_forward.1} parent=5 // pred_check_branch
        %835 = sbr.rel (%p832) target = $region108
      $region107: #{nlu_forward.1} parent=5 // pred_region
        %s836 = ssub.s32 %s43, 1
        %s837 = sand.u32 %s162, 1
        %s838 = scalar_lea.sflag [#allocation4], %s837
        %s839 = sand.u32 %s162, 1
        %s840 = smul.addr %s839, 192
        %s841 = scalar_lea.vmem [#allocation3], %s840
        // Predicated region
        $region109: #{nlu_forward.1} parent=107 // pred_check
          %p842 = pneg %p175
        $region110: #{nlu_forward.1} parent=107 // pred_check_branch
          %844 = sbr.rel (%p842) target = $region112
        $region111: #{nlu_forward.1} parent=107 // pred_region
          %846 = dma.done %s838, 3072
        $region112: #{nlu_forward.1} parent=107 // pred_fallthru
          _
        %s847 = sand.u32 %s48, 1
        %s848 = scalar_lea.sflag [#allocation7], %s847
        %s849 = sand.u32 %s318, 1
        %s850 = smul.addr %s849, 128
        %s851 = scalar_lea.vmem [#allocation6], %s850
        // Predicated region
        $region113: #{nlu_forward.1} parent=107 // pred_check
          %p852 = pneg %p331
        $region114: #{nlu_forward.1} parent=107 // pred_check_branch
          %854 = sbr.rel (%p852) target = $region116
        $region115: #{nlu_forward.1} parent=107 // pred_region
          %856 = dma.done %s848, 2048
        $region116: #{nlu_forward.1} parent=107 // pred_fallthru
          _
        %s857 = sand.u32 %s48, 1
        %s858 = scalar_lea.sflag [#allocation7], %s857
        %s859 = sand.u32 %s370, 1
        %s860 = smul.addr %s859, 128
        %s861 = scalar_lea.vmem [#allocation8], %s860
        // Predicated region
        $region117: #{nlu_forward.1} parent=107 // pred_check
          %p862 = pneg %p383
        $region118: #{nlu_forward.1} parent=107 // pred_check_branch
          %864 = sbr.rel (%p862) target = $region120
        $region119: #{nlu_forward.1} parent=107 // pred_region
          %866 = dma.done %s858, 2048
        $region120: #{nlu_forward.1} parent=107 // pred_fallthru
          _
        // Predicated region
        $region121: #{nlu_forward.1} parent=107 // pred_check
          %p867 = pneg %p566
        $region122: #{nlu_forward.1} parent=107 // pred_check_branch
          %869 = sbr.rel (%p867) target = $region124
        $region123: #{nlu_forward.1} parent=107 // pred_region
          %871 = dma.done [#allocation10], 1024
        $region124: #{nlu_forward.1} parent=107 // pred_fallthru
          _
        %p872 = scmp.lt.s32.totalorder %s52, 1
        %s873 = scalar_select %p872, %s52, 1
        %s874 = smul.addr %s873, 8
        %s875 = scalar_lea.vmem %s0, %s874
        %p876 = pneg %p81
        %p877 = pneg %p78
        %p878 = scmp.lt.s32.totalorder %s52, 1
        %s879 = scalar_select %p878, %s52, 1
        %s880 = scalar_lea.vmem %s1, %s879
        %p881 = pneg %p107
        %p882 = pneg %p104
        %p883 = pneg %p128
        %p884 = pneg %p125
        %p885 = pneg %p149
        %p886 = pneg %p146
        %s887 = sand.u32 %s162, 1
        %s888 = scalar_lea.sflag [#allocation4], %s887
        %s889 = sand.u32 %s162, 1
        %s890 = smul.addr %s889, 192
        %s891 = scalar_lea.vmem [#allocation3], %s890
        %p892 = pneg %p175
        %p893 = pneg %p172
        %p894 = scmp.lt.s32.totalorder %s53, 1
        %s895 = scalar_select %p894, %s53, 1
        %s896 = smul.addr %s895, 12
        %s897 = scalar_lea.vmem %s5, %s896
        %p898 = pneg %p201
        %p899 = pneg %p198
        %p900 = scmp.lt.s32.totalorder %s53, 1
        %s901 = scalar_select %p900, %s53, 1
        %s902 = smul.addr %s901, 16
        %s903 = smul.addr %s902, 4
        %s904 = scalar_lea.vmem %s6, %s903
        %p905 = pneg %p227
        %p906 = pneg %p224
        %p907 = scmp.lt.s32.totalorder %s53, 1
        %s908 = scalar_select %p907, %s53, 1
        %s909 = scalar_lea.vmem %s7, %s908
        %p910 = pneg %p253
        %p911 = pneg %p250
        %p912 = scmp.lt.s32.totalorder %s53, 1
        %s913 = scalar_select %p912, %s53, 1
        %s914 = scalar_lea.vmem %s8, %s913
        %p915 = pneg %p279
        %p916 = pneg %p276
        %p917 = scmp.lt.s32.totalorder %s53, 1
        %s918 = scalar_select %p917, %s53, 1
        %s919 = scalar_lea.vmem %s9, %s918
        %p920 = pneg %p305
        %p921 = pneg %p302
        %s922 = sand.u32 %s48, 1
        %s923 = scalar_lea.sflag [#allocation7], %s922
        %s924 = sand.u32 %s318, 1
        %s925 = smul.addr %s924, 128
        %s926 = scalar_lea.vmem [#allocation6], %s925
        %p927 = pneg %p331
        %p928 = pneg %p328
        %p929 = scmp.lt.s32.totalorder %s53, 1
        %s930 = scalar_select %p929, %s53, 1
        %s931 = smul.addr %s930, 2
        %s932 = scalar_lea.vmem %s11, %s931
        %p933 = pneg %p357
        %p934 = pneg %p354
        %s935 = sand.u32 %s48, 1
        %s936 = scalar_lea.sflag [#allocation7], %s935
        %s937 = sand.u32 %s370, 1
        %s938 = smul.addr %s937, 128
        %s939 = scalar_lea.vmem [#allocation8], %s938
        %p940 = pneg %p383
        %p941 = pneg %p380
        %p942 = scmp.lt.s32.totalorder %s53, 1
        %s943 = scalar_select %p942, %s53, 1
        %s944 = scalar_lea.vmem %s13, %s943
        %p945 = pneg %p409
        %p946 = pneg %p406
        %p947 = scmp.lt.s32.totalorder %s53, 1
        %s948 = scalar_select %p947, %s53, 1
        %s949 = scalar_lea.vmem %s14, %s948
        %p950 = pneg %p435
        %p951 = pneg %p432
        %p952 = scmp.lt.s32.totalorder %s53, 1
        %s953 = scalar_select %p952, %s53, 1
        %s954 = scalar_lea.vmem %s15, %s953
        %p955 = pneg %p461
        %p956 = pneg %p458
        %p957 = pneg %p482
        %p958 = pneg %p479
        %p959 = pneg %p503
        %p960 = pneg %p500
        %p961 = pneg %p524
        %p962 = pneg %p521
        %p963 = pneg %p545
        %p964 = pneg %p542
        %p965 = pneg %p566
        %p966 = pneg %p563
        %p967 = pneg %p587
        %p968 = pneg %p584
        %p969 = pneg %p613
        %p970 = pneg %p610
        %s971 = sand.u32 %s600, 1
        %s972 = scalar_lea.sflag [#allocation5], %s971
        %s973 = sand.u32 %s600, 1
        %s974 = scalar_lea.vmem [#allocation11], %s973
        %p975 = pneg %p639
        %p976 = pneg %p636
        %s977 = sand.u32 %s626, 1
        %s978 = scalar_lea.sflag [#allocation13], %s977
        %s979 = sand.u32 %s626, 1
        %s980 = smul.addr %s979, 8
        %s981 = scalar_lea.vmem [#allocation12], %s980
        %p982 = scmp.lt.s32.totalorder %s52, 1
        %s983 = scalar_select %p982, %s52, 1
        %s984 = smul.addr %s983, 8
        %s985 = scalar_lea.vmem %s0, %s984
        %p986 = scmp.lt.s32.totalorder %s52, 1
        %s987 = scalar_select %p986, %s52, 1
        %s988 = scalar_lea.vmem %s1, %s987
        %p989 = scmp.lt.s32.totalorder %s53, 1
        %s990 = scalar_select %p989, %s53, 1
        %s991 = smul.addr %s990, 12
        %s992 = scalar_lea.vmem %s5, %s991
        %p993 = scmp.lt.s32.totalorder %s53, 1
        %s994 = scalar_select %p993, %s53, 1
        %s995 = smul.addr %s994, 16
        %s996 = smul.addr %s995, 4
        %s997 = scalar_lea.vmem %s6, %s996
        %p998 = scmp.lt.s32.totalorder %s53, 1
        %s999 = scalar_select %p998, %s53, 1
        %s1000 = scalar_lea.vmem %s7, %s999
        %p1001 = scmp.lt.s32.totalorder %s53, 1
        %s1002 = scalar_select %p1001, %s53, 1
        %s1003 = scalar_lea.vmem %s8, %s1002
        %p1004 = scmp.lt.s32.totalorder %s53, 1
        %s1005 = scalar_select %p1004, %s53, 1
        %s1006 = scalar_lea.vmem %s9, %s1005
        %p1007 = scmp.lt.s32.totalorder %s53, 1
        %s1008 = scalar_select %p1007, %s53, 1
        %s1009 = smul.addr %s1008, 2
        %s1010 = scalar_lea.vmem %s11, %s1009
        %p1011 = scmp.lt.s32.totalorder %s53, 1
        %s1012 = scalar_select %p1011, %s53, 1
        %s1013 = scalar_lea.vmem %s13, %s1012
        %p1014 = scmp.lt.s32.totalorder %s53, 1
        %s1015 = scalar_select %p1014, %s53, 1
        %s1016 = scalar_lea.vmem %s14, %s1015
        %p1017 = scmp.lt.s32.totalorder %s53, 1
        %s1018 = scalar_select %p1017, %s53, 1
        %s1019 = scalar_lea.vmem %s15, %s1018
        %p1021 = scmp.eq.s32.totalorder %s53, 0
        // Predicated region
        $region125: #{nlu_forward.1} parent=107 // pred_check
          %p1022 = pneg %p1021
        $region126: #{nlu_forward.1} parent=107 // pred_check_branch
          %1024 = sbr.rel (%p1022) target = $region128
        $region127: #{nlu_forward.1} parent=107 // pred_region
          %v1025 = vld [vmem:[%s985] sm:$0xff]
          %v1026 = vld [vmem:[%s2] sm:$0x1]
          %v1027 = vld [vmem:[%s3] sm:$0x1]
          %1028 = vadd.xlane.f32.xlu0 %v1025
          %v1029 = vpop.xlane.xlu0 %1028
          %v1030 = vrcp.pop 128.0
          %v1031 = vmul.f32 128.0, %v1030
          %v1032 = vsub.f32 1.0, %v1031
          %v1033 = vmul.f32 %v1030, %v1032
          %v1034 = vadd.f32 %v1030, %v1033
          %vm1035 = vweird.f32 %v1030
          %v1036 = vsel %vm1035, %v1030, %v1034
          %v1037 = vmul.f32 %v1029, %v1036
          %v1038 = vsub.f32 %v1025, %v1037
          %v1039 = vmul.f32 %v1038, %v1038
          %1040 = vadd.xlane.f32.xlu0 %v1039
          %v1041 = vpop.xlane.xlu0 %1040
          %v1042 = vmul.f32 %v1041, %v1036
          %v1043 = vadd.f32 %v1042, 1e-12
          %v1044 = vrsqrt.pop %v1043
          %v1045 = vmul.f32 %v1044, %v1043
          %v1046 = vmul.f32 %v1045, %v1044
          %v1047 = vmul.f32 0.5, %v1046
          %v1048 = vsub.f32 1.5, %v1047
          %v1049 = vmul.f32 %v1044, %v1048
          %vm1050 = vweird.f32 %v1043
          %vm1051 = vweird.f32 %v1044
          %vm1052 = vmor %vm1050, %vm1051
          %v1053 = vsel %vm1052, %v1044, %v1049
          %v1054 = vmul.f32 %v1038, %v1053
          %v1056 = vperm.slane %v1026, 0
          %v1058 = vmul.f32 %v1054, %v1056
          %v1060 = vperm.slane %v1027, 0
          %v1062 = vadd.f32 %v1058, %v1060
          %1063 = vst [vmem:[#allocation2] sm:$0xff] %v1062
        $region128: #{nlu_forward.1} parent=107 // pred_fallthru
          _
        %v1064 = vld [vmem:[#allocation2] sm:$0xff]
        %v1065 = vpack.c.bf16 %v1064, %v1064
        %v1066 = vld [vmem:[%s841] sm:$0xf]
        %v1067 = vld [vmem:[%s841 + $0x4] sm:$0xf]
        %v1068 = vld [vmem:[%s841 + $0x8] sm:$0xf]
        %v1069 = vld [vmem:[%s841 + $0xc] sm:$0xf]
        %v1070 = vld [vmem:[%s841 + $0x10] sm:$0xf]
        %v1071 = vld [vmem:[%s841 + $0x14] sm:$0xf]
        %v1072 = vld [vmem:[%s841 + $0x18] sm:$0xf]
        %v1073 = vld [vmem:[%s841 + $0x1c] sm:$0xf]
        %v1074 = vld [vmem:[%s841 + $0x20] sm:$0xf]
        %v1075 = vld [vmem:[%s841 + $0x24] sm:$0xf]
        %v1076 = vld [vmem:[%s841 + $0x28] sm:$0xf]
        %v1077 = vld [vmem:[%s841 + $0x2c] sm:$0xf]
        %v1078 = vld [vmem:[%s841 + $0x30] sm:$0xf]
        %v1079 = vld [vmem:[%s841 + $0x34] sm:$0xf]
        %v1080 = vld [vmem:[%s841 + $0x38] sm:$0xf]
        %v1081 = vld [vmem:[%s841 + $0x3c] sm:$0xf]
        %v1082 = vld [vmem:[%s841 + $0x40] sm:$0xf]
        %v1083 = vld [vmem:[%s841 + $0x44] sm:$0xf]
        %v1084 = vld [vmem:[%s841 + $0x48] sm:$0xf]
        %v1085 = vld [vmem:[%s841 + $0x4c] sm:$0xf]
        %v1086 = vld [vmem:[%s841 + $0x50] sm:$0xf]
        %v1087 = vld [vmem:[%s841 + $0x54] sm:$0xf]
        %v1088 = vld [vmem:[%s841 + $0x58] sm:$0xf]
        %v1089 = vld [vmem:[%s841 + $0x5c] sm:$0xf]
        %v1090 = vld [vmem:[%s841 + $0x60] sm:$0xf]
        %v1091 = vld [vmem:[%s841 + $0x64] sm:$0xf]
        %v1092 = vld [vmem:[%s841 + $0x68] sm:$0xf]
        %v1093 = vld [vmem:[%s841 + $0x6c] sm:$0xf]
        %v1094 = vld [vmem:[%s841 + $0x70] sm:$0xf]
        %v1095 = vld [vmem:[%s841 + $0x74] sm:$0xf]
        %v1096 = vld [vmem:[%s841 + $0x78] sm:$0xf]
        %v1097 = vld [vmem:[%s841 + $0x7c] sm:$0xf]
        %v1098 = vld [vmem:[%s841 + $0x80] sm:$0xf]
        %v1099 = vld [vmem:[%s841 + $0x84] sm:$0xf]
        %v1100 = vld [vmem:[%s841 + $0x88] sm:$0xf]
        %v1101 = vld [vmem:[%s841 + $0x8c] sm:$0xf]
        %v1102 = vld [vmem:[%s841 + $0x90] sm:$0xf]
        %v1103 = vld [vmem:[%s841 + $0x94] sm:$0xf]
        %v1104 = vld [vmem:[%s841 + $0x98] sm:$0xf]
        %v1105 = vld [vmem:[%s841 + $0x9c] sm:$0xf]
        %v1106 = vld [vmem:[%s841 + $0xa0] sm:$0xf]
        %v1107 = vld [vmem:[%s841 + $0xa4] sm:$0xf]
        %v1108 = vld [vmem:[%s841 + $0xa8] sm:$0xf]
        %v1109 = vld [vmem:[%s841 + $0xac] sm:$0xf]
        %v1110 = vld [vmem:[%s841 + $0xb0] sm:$0xf]
        %v1111 = vld [vmem:[%s841 + $0xb4] sm:$0xf]
        %v1112 = vld [vmem:[%s841 + $0xb8] sm:$0xf]
        %v1113 = vld [vmem:[%s841 + $0xbc] sm:$0xf]
        %v1114 = vld [vmem:[%s992] sm:$0x1]
        %v1115 = vld [vmem:[%s992 + $0x1] sm:$0x1]
        %v1116 = vld [vmem:[%s992 + $0x2] sm:$0x1]
        %v1117 = vld [vmem:[%s992 + $0x3] sm:$0x1]
        %v1118 = vld [vmem:[%s992 + $0x4] sm:$0x1]
        %v1119 = vld [vmem:[%s992 + $0x5] sm:$0x1]
        %v1120 = vld [vmem:[%s992 + $0x6] sm:$0x1]
        %v1121 = vld [vmem:[%s992 + $0x7] sm:$0x1]
        %v1122 = vld [vmem:[%s992 + $0x8] sm:$0x1]
        %v1123 = vld [vmem:[%s992 + $0x9] sm:$0x1]
        %v1124 = vld [vmem:[%s992 + $0xa] sm:$0x1]
        %v1125 = vld [vmem:[%s992 + $0xb] sm:$0x1]
        %v1138 = vperm.slane %v1114, 0
        %v1139 = vperm.slane %v1115, 0
        %v1140 = vperm.slane %v1116, 0
        %v1141 = vperm.slane %v1117, 0
        %v1142 = vperm.slane %v1118, 0
        %v1143 = vperm.slane %v1119, 0
        %v1144 = vperm.slane %v1120, 0
        %v1145 = vperm.slane %v1121, 0
        %v1146 = vperm.slane %v1122, 0
        %v1147 = vperm.slane %v1123, 0
        %v1148 = vperm.slane %v1124, 0
        %v1149 = vperm.slane %v1125, 0
        %v1166 = vunpack.c.l.b16 %v1066
        %v1167 = vunpack.c.l.b16 %v1067
        %v1168 = vunpack.c.l.b16 %v1068
        %v1169 = vunpack.c.l.b16 %v1069
        %v1170 = vpack.c.b16 %v1167, %v1166
        %v1171 = vpack.c.b16 %v1169, %v1168
        %1174 = vmatpush.bf16.xpose.msra.mxu0 0
        %1175 = vmatpush.bf16.xpose.msra.mxu0 0
        %1176 = vmatpush.bf16.xpose.msra.mxu0 0
        %1177 = vmatpush.bf16.xpose.msra.mxu0 0
        %1178 = vmatpush.bf16.xpose.msra.mxu0 0
        %1179 = vmatpush.bf16.xpose.msra.mxu0 0
        %1180 = vmatpush.bf16.xpose.msra.mxu0 %v1171
        %1181 = vmatpush.bf16.xpose.msra.mxu0 %v1170
        %1182 = vmatmul.bf16.gmra.mxu0 %v1065
        %v1183 = vpop.f32.mrf.mxu0
        %v1184 = vadd.f32 %v1138, %v1183
        %v1185 = vpop.f32.mrf.mxu0
        %1186 = vdwg.mxu0
        %v1191 = vunpack.c.l.b16 %v1070
        %v1192 = vunpack.c.l.b16 %v1071
        %v1193 = vunpack.c.l.b16 %v1072
        %v1194 = vunpack.c.l.b16 %v1073
        %v1195 = vpack.c.b16 %v1192, %v1191
        %v1196 = vpack.c.b16 %v1194, %v1193
        %1199 = vmatpush.bf16.xpose.msra.mxu0 0
        %1200 = vmatpush.bf16.xpose.msra.mxu0 0
        %1201 = vmatpush.bf16.xpose.msra.mxu0 0
        %1202 = vmatpush.bf16.xpose.msra.mxu0 0
        %1203 = vmatpush.bf16.xpose.msra.mxu0 0
        %1204 = vmatpush.bf16.xpose.msra.mxu0 0
        %1205 = vmatpush.bf16.xpose.msra.mxu0 %v1196
        %1206 = vmatpush.bf16.xpose.msra.mxu0 %v1195
        %1207 = vmatmul.bf16.gmra.mxu0 %v1065
        %v1208 = vpop.f32.mrf.mxu0
        %v1209 = vadd.f32 %v1139, %v1208
        %v1210 = vpop.f32.mrf.mxu0
        %1211 = vdwg.mxu0
        %v1216 = vunpack.c.l.b16 %v1074
        %v1217 = vunpack.c.l.b16 %v1075
        %v1218 = vunpack.c.l.b16 %v1076
        %v1219 = vunpack.c.l.b16 %v1077
        %v1220 = vpack.c.b16 %v1217, %v1216
        %v1221 = vpack.c.b16 %v1219, %v1218
        %1224 = vmatpush.bf16.xpose.msra.mxu0 0
        %1225 = vmatpush.bf16.xpose.msra.mxu0 0
        %1226 = vmatpush.bf16.xpose.msra.mxu0 0
        %1227 = vmatpush.bf16.xpose.msra.mxu0 0
        %1228 = vmatpush.bf16.xpose.msra.mxu0 0
        %1229 = vmatpush.bf16.xpose.msra.mxu0 0
        %1230 = vmatpush.bf16.xpose.msra.mxu0 %v1221
        %1231 = vmatpush.bf16.xpose.msra.mxu0 %v1220
        %1232 = vmatmul.bf16.gmra.mxu0 %v1065
        %v1233 = vpop.f32.mrf.mxu0
        %v1234 = vadd.f32 %v1140, %v1233
        %v1235 = vpop.f32.mrf.mxu0
        %1236 = vdwg.mxu0
        %v1241 = vunpack.c.l.b16 %v1078
        %v1242 = vunpack.c.l.b16 %v1079
        %v1243 = vunpack.c.l.b16 %v1080
        %v1244 = vunpack.c.l.b16 %v1081
        %v1245 = vpack.c.b16 %v1242, %v1241
        %v1246 = vpack.c.b16 %v1244, %v1243
        %1249 = vmatpush.bf16.xpose.msra.mxu0 0
        %1250 = vmatpush.bf16.xpose.msra.mxu0 0
        %1251 = vmatpush.bf16.xpose.msra.mxu0 0
        %1252 = vmatpush.bf16.xpose.msra.mxu0 0
        %1253 = vmatpush.bf16.xpose.msra.mxu0 0
        %1254 = vmatpush.bf16.xpose.msra.mxu0 0
        %1255 = vmatpush.bf16.xpose.msra.mxu0 %v1246
        %1256 = vmatpush.bf16.xpose.msra.mxu0 %v1245
        %1257 = vmatmul.bf16.gmra.mxu0 %v1065
        %v1258 = vpop.f32.mrf.mxu0
        %v1259 = vadd.f32 %v1141, %v1258
        %v1260 = vpop.f32.mrf.mxu0
        %1261 = vdwg.mxu0
        %v1266 = vunpack.c.l.b16 %v1082
        %v1267 = vunpack.c.l.b16 %v1083
        %v1268 = vunpack.c.l.b16 %v1084
        %v1269 = vunpack.c.l.b16 %v1085
        %v1270 = vpack.c.b16 %v1267, %v1266
        %v1271 = vpack.c.b16 %v1269, %v1268
        %1274 = vmatpush.bf16.xpose.msra.mxu0 0
        %1275 = vmatpush.bf16.xpose.msra.mxu0 0
        %1276 = vmatpush.bf16.xpose.msra.mxu0 0
        %1277 = vmatpush.bf16.xpose.msra.mxu0 0
        %1278 = vmatpush.bf16.xpose.msra.mxu0 0
        %1279 = vmatpush.bf16.xpose.msra.mxu0 0
        %1280 = vmatpush.bf16.xpose.msra.mxu0 %v1271
        %1281 = vmatpush.bf16.xpose.msra.mxu0 %v1270
        %1282 = vmatmul.bf16.gmra.mxu0 %v1065
        %v1283 = vpop.f32.mrf.mxu0
        %v1284 = vadd.f32 %v1142, %v1283
        %v1285 = vpop.f32.mrf.mxu0
        %1286 = vdwg.mxu0
        %v1291 = vunpack.c.l.b16 %v1086
        %v1292 = vunpack.c.l.b16 %v1087
        %v1293 = vunpack.c.l.b16 %v1088
        %v1294 = vunpack.c.l.b16 %v1089
        %v1295 = vpack.c.b16 %v1292, %v1291
        %v1296 = vpack.c.b16 %v1294, %v1293
        %1299 = vmatpush.bf16.xpose.msra.mxu0 0
        %1300 = vmatpush.bf16.xpose.msra.mxu0 0
        %1301 = vmatpush.bf16.xpose.msra.mxu0 0
        %1302 = vmatpush.bf16.xpose.msra.mxu0 0
        %1303 = vmatpush.bf16.xpose.msra.mxu0 0
        %1304 = vmatpush.bf16.xpose.msra.mxu0 0
        %1305 = vmatpush.bf16.xpose.msra.mxu0 %v1296
        %1306 = vmatpush.bf16.xpose.msra.mxu0 %v1295
        %1307 = vmatmul.bf16.gmra.mxu0 %v1065
        %v1308 = vpop.f32.mrf.mxu0
        %v1309 = vadd.f32 %v1143, %v1308
        %v1310 = vpop.f32.mrf.mxu0
        %1311 = vdwg.mxu0
        %v1316 = vunpack.c.l.b16 %v1090
        %v1317 = vunpack.c.l.b16 %v1091
        %v1318 = vunpack.c.l.b16 %v1092
        %v1319 = vunpack.c.l.b16 %v1093
        %v1320 = vpack.c.b16 %v1317, %v1316
        %v1321 = vpack.c.b16 %v1319, %v1318
        %1324 = vmatpush.bf16.xpose.msra.mxu0 0
        %1325 = vmatpush.bf16.xpose.msra.mxu0 0
        %1326 = vmatpush.bf16.xpose.msra.mxu0 0
        %1327 = vmatpush.bf16.xpose.msra.mxu0 0
        %1328 = vmatpush.bf16.xpose.msra.mxu0 0
        %1329 = vmatpush.bf16.xpose.msra.mxu0 0
        %1330 = vmatpush.bf16.xpose.msra.mxu0 %v1321
        %1331 = vmatpush.bf16.xpose.msra.mxu0 %v1320
        %1332 = vmatmul.bf16.gmra.mxu0 %v1065
        %v1333 = vpop.f32.mrf.mxu0
        %v1334 = vadd.f32 %v1144, %v1333
        %v1335 = vpop.f32.mrf.mxu0
        %1336 = vdwg.mxu0
        %v1341 = vunpack.c.l.b16 %v1094
        %v1342 = vunpack.c.l.b16 %v1095
        %v1343 = vunpack.c.l.b16 %v1096
        %v1344 = vunpack.c.l.b16 %v1097
        %v1345 = vpack.c.b16 %v1342, %v1341
        %v1346 = vpack.c.b16 %v1344, %v1343
        %1349 = vmatpush.bf16.xpose.msra.mxu0 0
        %1350 = vmatpush.bf16.xpose.msra.mxu0 0
        %1351 = vmatpush.bf16.xpose.msra.mxu0 0
        %1352 = vmatpush.bf16.xpose.msra.mxu0 0
        %1353 = vmatpush.bf16.xpose.msra.mxu0 0
        %1354 = vmatpush.bf16.xpose.msra.mxu0 0
        %1355 = vmatpush.bf16.xpose.msra.mxu0 %v1346
        %1356 = vmatpush.bf16.xpose.msra.mxu0 %v1345
        %1357 = vmatmul.bf16.gmra.mxu0 %v1065
        %v1358 = vpop.f32.mrf.mxu0
        %v1359 = vadd.f32 %v1145, %v1358
        %v1360 = vpop.f32.mrf.mxu0
        %1361 = vdwg.mxu0
        %v1366 = vunpack.c.l.b16 %v1098
        %v1367 = vunpack.c.l.b16 %v1099
        %v1368 = vunpack.c.l.b16 %v1100
        %v1369 = vunpack.c.l.b16 %v1101
        %v1370 = vpack.c.b16 %v1367, %v1366
        %v1371 = vpack.c.b16 %v1369, %v1368
        %1374 = vmatpush.bf16.xpose.msra.mxu0 0
        %1375 = vmatpush.bf16.xpose.msra.mxu0 0
        %1376 = vmatpush.bf16.xpose.msra.mxu0 0
        %1377 = vmatpush.bf16.xpose.msra.mxu0 0
        %1378 = vmatpush.bf16.xpose.msra.mxu0 0
        %1379 = vmatpush.bf16.xpose.msra.mxu0 0
        %1380 = vmatpush.bf16.xpose.msra.mxu0 %v1371
        %1381 = vmatpush.bf16.xpose.msra.mxu0 %v1370
        %1382 = vmatmul.bf16.gmra.mxu0 %v1065
        %v1383 = vpop.f32.mrf.mxu0
        %v1384 = vadd.f32 %v1146, %v1383
        %v1385 = vpop.f32.mrf.mxu0
        %1386 = vdwg.mxu0
        %v1391 = vunpack.c.l.b16 %v1102
        %v1392 = vunpack.c.l.b16 %v1103
        %v1393 = vunpack.c.l.b16 %v1104
        %v1394 = vunpack.c.l.b16 %v1105
        %v1395 = vpack.c.b16 %v1392, %v1391
        %v1396 = vpack.c.b16 %v1394, %v1393
        %1399 = vmatpush.bf16.xpose.msra.mxu0 0
        %1400 = vmatpush.bf16.xpose.msra.mxu0 0
        %1401 = vmatpush.bf16.xpose.msra.mxu0 0
        %1402 = vmatpush.bf16.xpose.msra.mxu0 0
        %1403 = vmatpush.bf16.xpose.msra.mxu0 0
        %1404 = vmatpush.bf16.xpose.msra.mxu0 0
        %1405 = vmatpush.bf16.xpose.msra.mxu0 %v1396
        %1406 = vmatpush.bf16.xpose.msra.mxu0 %v1395
        %1407 = vmatmul.bf16.gmra.mxu0 %v1065
        %v1408 = vpop.f32.mrf.mxu0
        %v1409 = vadd.f32 %v1147, %v1408
        %v1410 = vpop.f32.mrf.mxu0
        %1411 = vdwg.mxu0
        %v1416 = vunpack.c.l.b16 %v1106
        %v1417 = vunpack.c.l.b16 %v1107
        %v1418 = vunpack.c.l.b16 %v1108
        %v1419 = vunpack.c.l.b16 %v1109
        %v1420 = vpack.c.b16 %v1417, %v1416
        %v1421 = vpack.c.b16 %v1419, %v1418
        %1424 = vmatpush.bf16.xpose.msra.mxu0 0
        %1425 = vmatpush.bf16.xpose.msra.mxu0 0
        %1426 = vmatpush.bf16.xpose.msra.mxu0 0
        %1427 = vmatpush.bf16.xpose.msra.mxu0 0
        %1428 = vmatpush.bf16.xpose.msra.mxu0 0
        %1429 = vmatpush.bf16.xpose.msra.mxu0 0
        %1430 = vmatpush.bf16.xpose.msra.mxu0 %v1421
        %1431 = vmatpush.bf16.xpose.msra.mxu0 %v1420
        %1432 = vmatmul.bf16.gmra.mxu0 %v1065
        %v1433 = vpop.f32.mrf.mxu0
        %v1434 = vadd.f32 %v1148, %v1433
        %v1435 = vpop.f32.mrf.mxu0
        %1436 = vdwg.mxu0
        %v1441 = vunpack.c.l.b16 %v1110
        %v1442 = vunpack.c.l.b16 %v1111
        %v1443 = vunpack.c.l.b16 %v1112
        %v1444 = vunpack.c.l.b16 %v1113
        %v1445 = vpack.c.b16 %v1442, %v1441
        %v1446 = vpack.c.b16 %v1444, %v1443
        %1449 = vmatpush.bf16.xpose.msra.mxu0 0
        %1450 = vmatpush.bf16.xpose.msra.mxu0 0
        %1451 = vmatpush.bf16.xpose.msra.mxu0 0
        %1452 = vmatpush.bf16.xpose.msra.mxu0 0
        %1453 = vmatpush.bf16.xpose.msra.mxu0 0
        %1454 = vmatpush.bf16.xpose.msra.mxu0 0
        %1455 = vmatpush.bf16.xpose.msra.mxu0 %v1446
        %1456 = vmatpush.bf16.xpose.msra.mxu0 %v1445
        %1457 = vmatmul.bf16.gmra.mxu0 %v1065
        %v1458 = vpop.f32.mrf.mxu0
        %v1459 = vadd.f32 %v1149, %v1458
        %v1460 = vpop.f32.mrf.mxu0
        %1461 = vdwg.mxu0
        %v1462 = vpack.c.bf16 %v1184, %v1184
        %v1463 = vpack.c.bf16 %v1209, %v1209
        %v1464 = vpack.c.bf16 %v1234, %v1234
        %v1465 = vpack.c.bf16 %v1259, %v1259
        %v1466 = vpack.c.bf16 %v1284, %v1284
        %v1467 = vpack.c.bf16 %v1309, %v1309
        %v1468 = vpack.c.bf16 %v1334, %v1334
        %v1469 = vpack.c.bf16 %v1359, %v1359
        %vm1470 = vcmask 261120
        %v1472 = vsel %vm1470, %v1462, 0
        %v1475 = vsel %vm1470, %v1466, 0
        %1477 = vmatpush.bf16.xpose.msra.mxu0 0
        %1478 = vmatpush.bf16.xpose.msra.mxu0 0
        %1479 = vmatpush.bf16.xpose.msra.mxu0 0
        %1480 = vmatpush.bf16.xpose.msra.mxu0 0
        %1481 = vmatpush.bf16.xpose.msra.mxu0 0
        %1482 = vmatpush.bf16.xpose.msra.mxu0 0
        %1483 = vmatpush.bf16.xpose.msra.mxu0 0
        %1484 = vmatpush.bf16.xpose.msra.mxu0 %v1475
        %1485 = vmatmul.bf16.gmra.mxu0 %v1472
        %v1486 = vpop.f32.mrf.mxu0
        %v1487 = vadd.f32 0.0, %v1486
        %v1488 = vpop.f32.mrf.mxu0
        %1489 = vdwg.mxu0
        %v1491 = vsel %vm1470, %v1463, 0
        %v1494 = vsel %vm1470, %v1467, 0
        %1496 = vmatpush.bf16.xpose.msra.mxu0 0
        %1497 = vmatpush.bf16.xpose.msra.mxu0 0
        %1498 = vmatpush.bf16.xpose.msra.mxu0 0
        %1499 = vmatpush.bf16.xpose.msra.mxu0 0
        %1500 = vmatpush.bf16.xpose.msra.mxu0 0
        %1501 = vmatpush.bf16.xpose.msra.mxu0 0
        %1502 = vmatpush.bf16.xpose.msra.mxu0 0
        %1503 = vmatpush.bf16.xpose.msra.mxu0 %v1494
        %1504 = vmatmul.bf16.gmra.mxu0 %v1491
        %v1505 = vpop.f32.mrf.mxu0
        %v1506 = vadd.f32 0.0, %v1505
        %v1507 = vpop.f32.mrf.mxu0
        %1508 = vdwg.mxu0
        %v1510 = vsel %vm1470, %v1464, 0
        %v1513 = vsel %vm1470, %v1468, 0
        %1515 = vmatpush.bf16.xpose.msra.mxu0 0
        %1516 = vmatpush.bf16.xpose.msra.mxu0 0
        %1517 = vmatpush.bf16.xpose.msra.mxu0 0
        %1518 = vmatpush.bf16.xpose.msra.mxu0 0
        %1519 = vmatpush.bf16.xpose.msra.mxu0 0
        %1520 = vmatpush.bf16.xpose.msra.mxu0 0
        %1521 = vmatpush.bf16.xpose.msra.mxu0 0
        %1522 = vmatpush.bf16.xpose.msra.mxu0 %v1513
        %1523 = vmatmul.bf16.gmra.mxu0 %v1510
        %v1524 = vpop.f32.mrf.mxu0
        %v1525 = vadd.f32 0.0, %v1524
        %v1526 = vpop.f32.mrf.mxu0
        %1527 = vdwg.mxu0
        %v1529 = vsel %vm1470, %v1465, 0
        %v1532 = vsel %vm1470, %v1469, 0
        %1534 = vmatpush.bf16.xpose.msra.mxu0 0
        %1535 = vmatpush.bf16.xpose.msra.mxu0 0
        %1536 = vmatpush.bf16.xpose.msra.mxu0 0
        %1537 = vmatpush.bf16.xpose.msra.mxu0 0
        %1538 = vmatpush.bf16.xpose.msra.mxu0 0
        %1539 = vmatpush.bf16.xpose.msra.mxu0 0
        %1540 = vmatpush.bf16.xpose.msra.mxu0 0
        %1541 = vmatpush.bf16.xpose.msra.mxu0 %v1532
        %1542 = vmatmul.bf16.gmra.mxu0 %v1529
        %v1543 = vpop.f32.mrf.mxu0
        %v1544 = vadd.f32 0.0, %v1543
        %v1545 = vpop.f32.mrf.mxu0
        %1546 = vdwg.mxu0
        %v1547 = vmul.f32 %v1487, 0.17677669
        %v1548 = vmul.f32 %v1506, 0.17677669
        %v1549 = vmul.f32 %v1525, 0.17677669
        %v1550 = vmul.f32 %v1544, 0.17677669
        %v1551 = vld [vmem:[%s988] sm:$0x1]
        %v1553 = vperm.slane %v1551, 0
        %v1555 = vadd.f32 %v1547, %v1553
        %v1556 = vadd.f32 %v1548, %v1553
        %v1557 = vadd.f32 %v1549, %v1553
        %v1558 = vadd.f32 %v1550, %v1553
        %vm1559 = vcmask 64512
        %v1560 = vsel %vm1559, %v1555, -inf
        %1561 = vmax.xlane.f32.xlu0 %v1560
        %v1562 = vpop.xlane.xlu0 %1561
        %v1563 = vsel %vm1559, %v1556, -inf
        %1564 = vmax.xlane.f32.xlu0 %v1563
        %v1565 = vpop.xlane.xlu0 %1564
        %v1566 = vsel %vm1559, %v1557, -inf
        %1567 = vmax.xlane.f32.xlu0 %v1566
        %v1568 = vpop.xlane.xlu0 %1567
        %v1569 = vsel %vm1559, %v1558, -inf
        %1570 = vmax.xlane.f32.xlu0 %v1569
        %v1571 = vpop.xlane.xlu0 %1570
        %v1572 = vsub.f32 %v1555, %v1562
        %v1573 = vsub.f32 %v1556, %v1565
        %v1574 = vsub.f32 %v1557, %v1568
        %v1575 = vsub.f32 %v1558, %v1571
        %v1576 = vmul.f32 %v1572, 1.442695
        %v1577 = vpow.pop %v1576
        %v1578 = vmul.f32 %v1573, 1.442695
        %v1579 = vpow.pop %v1578
        %v1580 = vmul.f32 %v1574, 1.442695
        %v1581 = vpow.pop %v1580
        %v1582 = vmul.f32 %v1575, 1.442695
        %v1583 = vpow.pop %v1582
        %v1584 = vsel %vm1559, %v1577, 0.0
        %1585 = vadd.xlane.f32.xlu0 %v1584
        %v1586 = vpop.xlane.xlu0 %1585
        %v1587 = vsel %vm1559, %v1579, 0.0
        %1588 = vadd.xlane.f32.xlu0 %v1587
        %v1589 = vpop.xlane.xlu0 %1588
        %v1590 = vsel %vm1559, %v1581, 0.0
        %1591 = vadd.xlane.f32.xlu0 %v1590
        %v1592 = vpop.xlane.xlu0 %1591
        %v1593 = vsel %vm1559, %v1583, 0.0
        %1594 = vadd.xlane.f32.xlu0 %v1593
        %v1595 = vpop.xlane.xlu0 %1594
        %v1596 = vrcp.pop %v1586
        %v1597 = vrcp.pop %v1589
        %v1598 = vrcp.pop %v1592
        %v1599 = vrcp.pop %v1595
        %v1600 = vmul.f32 %v1577, %v1596
        %v1601 = vmul.f32 %v1579, %v1597
        %v1602 = vmul.f32 %v1581, %v1598
        %v1603 = vmul.f32 %v1583, %v1599
        %v1604 = vpack.c.bf16 %v1600, %v1600
        %v1605 = vpack.c.bf16 %v1601, %v1601
        %v1606 = vpack.c.bf16 %v1602, %v1602
        %v1607 = vpack.c.bf16 %v1603, %v1603
        %v1608 = vpack.c.bf16 %v1384, %v1384
        %v1609 = vpack.c.bf16 %v1409, %v1409
        %v1610 = vpack.c.bf16 %v1434, %v1434
        %v1611 = vpack.c.bf16 %v1459, %v1459
        %v1613 = vsel %vm1559, %v1604, 0
        %vm1615 = vcmask 1043456
        %v1617 = vsel %vm1615, %v1608, 0
        %1619 = vmatpush.bf16.msra.mxu0 0
        %1620 = vmatpush.bf16.msra.mxu0 0
        %1621 = vmatpush.bf16.msra.mxu0 0
        %1622 = vmatpush.bf16.msra.mxu0 0
        %1623 = vmatpush.bf16.msra.mxu0 0
        %1624 = vmatpush.bf16.msra.mxu0 0
        %1625 = vmatpush.bf16.msra.mxu0 0
        %1626 = vmatpush.bf16.msra.mxu0 %v1617
        %1627 = vmatmul.bf16.gmra.mxu0 %v1613
        %v1628 = vpop.f32.mrf.mxu0
        %v1629 = vadd.f32 0.0, %v1628
        %v1630 = vpop.f32.mrf.mxu0
        %1631 = vdwg.mxu0
        %v1633 = vsel %vm1559, %v1605, 0
        %v1636 = vsel %vm1615, %v1609, 0
        %1638 = vmatpush.bf16.msra.mxu0 0
        %1639 = vmatpush.bf16.msra.mxu0 0
        %1640 = vmatpush.bf16.msra.mxu0 0
        %1641 = vmatpush.bf16.msra.mxu0 0
        %1642 = vmatpush.bf16.msra.mxu0 0
        %1643 = vmatpush.bf16.msra.mxu0 0
        %1644 = vmatpush.bf16.msra.mxu0 0
        %1645 = vmatpush.bf16.msra.mxu0 %v1636
        %1646 = vmatmul.bf16.gmra.mxu0 %v1633
        %v1647 = vpop.f32.mrf.mxu0
        %v1648 = vadd.f32 0.0, %v1647
        %v1649 = vpop.f32.mrf.mxu0
        %1650 = vdwg.mxu0
        %v1652 = vsel %vm1559, %v1606, 0
        %v1655 = vsel %vm1615, %v1610, 0
        %1657 = vmatpush.bf16.msra.mxu0 0
        %1658 = vmatpush.bf16.msra.mxu0 0
        %1659 = vmatpush.bf16.msra.mxu0 0
        %1660 = vmatpush.bf16.msra.mxu0 0
        %1661 = vmatpush.bf16.msra.mxu0 0
        %1662 = vmatpush.bf16.msra.mxu0 0
        %1663 = vmatpush.bf16.msra.mxu0 0
        %1664 = vmatpush.bf16.msra.mxu0 %v1655
        %1665 = vmatmul.bf16.gmra.mxu0 %v1652
        %v1666 = vpop.f32.mrf.mxu0
        %v1667 = vadd.f32 0.0, %v1666
        %v1668 = vpop.f32.mrf.mxu0
        %1669 = vdwg.mxu0
        %v1671 = vsel %vm1559, %v1607, 0
        %v1674 = vsel %vm1615, %v1611, 0
        %1676 = vmatpush.bf16.msra.mxu0 0
        %1677 = vmatpush.bf16.msra.mxu0 0
        %1678 = vmatpush.bf16.msra.mxu0 0
        %1679 = vmatpush.bf16.msra.mxu0 0
        %1680 = vmatpush.bf16.msra.mxu0 0
        %1681 = vmatpush.bf16.msra.mxu0 0
        %1682 = vmatpush.bf16.msra.mxu0 0
        %1683 = vmatpush.bf16.msra.mxu0 %v1674
        %1684 = vmatmul.bf16.gmra.mxu0 %v1671
        %v1685 = vpop.f32.mrf.mxu0
        %v1686 = vadd.f32 0.0, %v1685
        %v1687 = vpop.f32.mrf.mxu0
        %1688 = vdwg.mxu0
        %v1689 = vpack.c.bf16 %v1629, %v1629
        %v1690 = vpack.c.bf16 %v1648, %v1648
        %v1691 = vpack.c.bf16 %v1667, %v1667
        %v1692 = vpack.c.bf16 %v1686, %v1686
        %v1693 = vld [vmem:[%s997] sm:$0xf]
        %v1694 = vld [vmem:[%s997 + $0x4] sm:$0xf]
        %v1695 = vld [vmem:[%s997 + $0x8] sm:$0xf]
        %v1696 = vld [vmem:[%s997 + $0xc] sm:$0xf]
        %v1697 = vld [vmem:[%s997 + $0x10] sm:$0xf]
        %v1698 = vld [vmem:[%s997 + $0x14] sm:$0xf]
        %v1699 = vld [vmem:[%s997 + $0x18] sm:$0xf]
        %v1700 = vld [vmem:[%s997 + $0x1c] sm:$0xf]
        %v1701 = vld [vmem:[%s997 + $0x20] sm:$0xf]
        %v1702 = vld [vmem:[%s997 + $0x24] sm:$0xf]
        %v1703 = vld [vmem:[%s997 + $0x28] sm:$0xf]
        %v1704 = vld [vmem:[%s997 + $0x2c] sm:$0xf]
        %v1705 = vld [vmem:[%s997 + $0x30] sm:$0xf]
        %v1706 = vld [vmem:[%s997 + $0x34] sm:$0xf]
        %v1707 = vld [vmem:[%s997 + $0x38] sm:$0xf]
        %v1708 = vld [vmem:[%s997 + $0x3c] sm:$0xf]
        %v1713 = vunpack.c.l.b16 %v1693
        %v1714 = vunpack.c.l.b16 %v1694
        %v1715 = vunpack.c.l.b16 %v1695
        %v1716 = vunpack.c.l.b16 %v1696
        %v1717 = vpack.c.b16 %v1714, %v1713
        %v1718 = vpack.c.b16 %v1716, %v1715
        %v1722 = vsel %vm1470, %v1689, 0
        %1724 = vmatpush.bf16.msra.mxu0 0
        %1725 = vmatpush.bf16.msra.mxu0 0
        %1726 = vmatpush.bf16.msra.mxu0 0
        %1727 = vmatpush.bf16.msra.mxu0 0
        %1728 = vmatpush.bf16.msra.mxu0 0
        %1729 = vmatpush.bf16.msra.mxu0 0
        %1730 = vmatpush.bf16.msra.mxu0 %v1718
        %1731 = vmatpush.bf16.msra.mxu0 %v1717
        %1732 = vmatmul.bf16.gmra.mxu0 %v1722
        %v1733 = vpop.f32.mrf.mxu0
        %v1734 = vadd.f32 0.0, %v1733
        %v1735 = vpop.f32.mrf.mxu0
        %1736 = vdwg.mxu0
        %v1741 = vunpack.c.l.b16 %v1697
        %v1742 = vunpack.c.l.b16 %v1698
        %v1743 = vunpack.c.l.b16 %v1699
        %v1744 = vunpack.c.l.b16 %v1700
        %v1745 = vpack.c.b16 %v1742, %v1741
        %v1746 = vpack.c.b16 %v1744, %v1743
        %v1750 = vsel %vm1470, %v1690, 0
        %1752 = vmatpush.bf16.msra.mxu0 0
        %1753 = vmatpush.bf16.msra.mxu0 0
        %1754 = vmatpush.bf16.msra.mxu0 0
        %1755 = vmatpush.bf16.msra.mxu0 0
        %1756 = vmatpush.bf16.msra.mxu0 0
        %1757 = vmatpush.bf16.msra.mxu0 0
        %1758 = vmatpush.bf16.msra.mxu0 %v1746
        %1759 = vmatpush.bf16.msra.mxu0 %v1745
        %1760 = vmatmul.bf16.gmra.mxu0 %v1750
        %v1761 = vpop.f32.mrf.mxu0
        %v1762 = vadd.f32 0.0, %v1761
        %v1763 = vpop.f32.mrf.mxu0
        %1764 = vdwg.mxu0
        %v1769 = vunpack.c.l.b16 %v1701
        %v1770 = vunpack.c.l.b16 %v1702
        %v1771 = vunpack.c.l.b16 %v1703
        %v1772 = vunpack.c.l.b16 %v1704
        %v1773 = vpack.c.b16 %v1770, %v1769
        %v1774 = vpack.c.b16 %v1772, %v1771
        %v1778 = vsel %vm1470, %v1691, 0
        %1780 = vmatpush.bf16.msra.mxu0 0
        %1781 = vmatpush.bf16.msra.mxu0 0
        %1782 = vmatpush.bf16.msra.mxu0 0
        %1783 = vmatpush.bf16.msra.mxu0 0
        %1784 = vmatpush.bf16.msra.mxu0 0
        %1785 = vmatpush.bf16.msra.mxu0 0
        %1786 = vmatpush.bf16.msra.mxu0 %v1774
        %1787 = vmatpush.bf16.msra.mxu0 %v1773
        %1788 = vmatmul.bf16.gmra.mxu0 %v1778
        %v1789 = vpop.f32.mrf.mxu0
        %v1790 = vadd.f32 0.0, %v1789
        %v1791 = vpop.f32.mrf.mxu0
        %1792 = vdwg.mxu0
        %v1797 = vunpack.c.l.b16 %v1705
        %v1798 = vunpack.c.l.b16 %v1706
        %v1799 = vunpack.c.l.b16 %v1707
        %v1800 = vunpack.c.l.b16 %v1708
        %v1801 = vpack.c.b16 %v1798, %v1797
        %v1802 = vpack.c.b16 %v1800, %v1799
        %v1806 = vsel %vm1470, %v1692, 0
        %1808 = vmatpush.bf16.msra.mxu0 0
        %1809 = vmatpush.bf16.msra.mxu0 0
        %1810 = vmatpush.bf16.msra.mxu0 0
        %1811 = vmatpush.bf16.msra.mxu0 0
        %1812 = vmatpush.bf16.msra.mxu0 0
        %1813 = vmatpush.bf16.msra.mxu0 0
        %1814 = vmatpush.bf16.msra.mxu0 %v1802
        %1815 = vmatpush.bf16.msra.mxu0 %v1801
        %1816 = vmatmul.bf16.gmra.mxu0 %v1806
        %v1817 = vpop.f32.mrf.mxu0
        %v1818 = vadd.f32 0.0, %v1817
        %v1819 = vpop.f32.mrf.mxu0
        %1820 = vdwg.mxu0
        %v1821 = vadd.f32 %v1734, %v1762
        %v1822 = vadd.f32 %v1821, %v1790
        %v1823 = vadd.f32 %v1822, %v1818
        %v1824 = vld [vmem:[%s1000] sm:$0x1]
        %v1826 = vperm.slane %v1824, 0
        %v1828 = vadd.f32 %v1823, %v1826
        %v1829 = vadd.f32 %v1828, %v1064
        %v1830 = vld [vmem:[%s1003] sm:$0x1]
        %v1831 = vld [vmem:[%s1006] sm:$0x1]
        %1832 = vadd.xlane.f32.xlu0 %v1829
        %v1833 = vpop.xlane.xlu0 %1832
        %v1834 = vrcp.pop 128.0
        %v1835 = vmul.f32 128.0, %v1834
        %v1836 = vsub.f32 1.0, %v1835
        %v1837 = vmul.f32 %v1834, %v1836
        %v1838 = vadd.f32 %v1834, %v1837
        %vm1839 = vweird.f32 %v1834
        %v1840 = vsel %vm1839, %v1834, %v1838
        %v1841 = vmul.f32 %v1833, %v1840
        %v1842 = vsub.f32 %v1829, %v1841
        %v1843 = vmul.f32 %v1842, %v1842
        %1844 = vadd.xlane.f32.xlu0 %v1843
        %v1845 = vpop.xlane.xlu0 %1844
        %v1846 = vmul.f32 %v1845, %v1840
        %v1847 = vadd.f32 %v1846, 1e-12
        %v1848 = vrsqrt.pop %v1847
        %v1849 = vmul.f32 %v1848, %v1847
        %v1850 = vmul.f32 %v1849, %v1848
        %v1851 = vmul.f32 0.5, %v1850
        %v1852 = vsub.f32 1.5, %v1851
        %v1853 = vmul.f32 %v1848, %v1852
        %vm1854 = vweird.f32 %v1847
        %vm1855 = vweird.f32 %v1848
        %vm1856 = vmor %vm1854, %vm1855
        %v1857 = vsel %vm1856, %v1848, %v1853
        %v1858 = vmul.f32 %v1842, %v1857
        %v1860 = vperm.slane %v1830, 0
        %v1862 = vmul.f32 %v1858, %v1860
        %v1864 = vperm.slane %v1831, 0
        %v1866 = vadd.f32 %v1862, %v1864
        %v1867 = vld [vmem:[%s851] sm:$0xff]
        %v1868 = vld [vmem:[%s851 + $0x8] sm:$0xff]
        %v1869 = vld [vmem:[%s851 + $0x10] sm:$0xff]
        %v1870 = vld [vmem:[%s851 + $0x18] sm:$0xff]
        %v1871 = vld [vmem:[%s851 + $0x20] sm:$0xff]
        %v1872 = vld [vmem:[%s851 + $0x28] sm:$0xff]
        %v1873 = vld [vmem:[%s851 + $0x30] sm:$0xff]
        %v1874 = vld [vmem:[%s851 + $0x38] sm:$0xff]
        %v1875 = vld [vmem:[%s851 + $0x40] sm:$0xff]
        %v1876 = vld [vmem:[%s851 + $0x48] sm:$0xff]
        %v1877 = vld [vmem:[%s851 + $0x50] sm:$0xff]
        %v1878 = vld [vmem:[%s851 + $0x58] sm:$0xff]
        %v1879 = vld [vmem:[%s851 + $0x60] sm:$0xff]
        %v1880 = vld [vmem:[%s851 + $0x68] sm:$0xff]
        %v1881 = vld [vmem:[%s851 + $0x70] sm:$0xff]
        %v1882 = vld [vmem:[%s851 + $0x78] sm:$0xff]
        %v1883 = vpack.c.bf16 %v1866, %v1866
        %v1884 = vld [vmem:[%s1010] sm:$0x3]
        %v1886 = vperm.slane %v1884, 0
        %v1887 = vperm.slane %v1884, 1
        %v1906 = vunpack.c.l.b16 %v1867
        %v1907 = vunpack.c.h.b16 %v1867
        %v1908 = vunpack.c.l.b16 %v1868
        %v1909 = vunpack.c.h.b16 %v1868
        %v1910 = vunpack.c.l.b16 %v1869
        %v1911 = vunpack.c.h.b16 %v1869
        %v1912 = vunpack.c.l.b16 %v1870
        %v1913 = vunpack.c.h.b16 %v1870
        %v1914 = vunpack.c.l.b16 %v1871
        %v1915 = vunpack.c.h.b16 %v1871
        %v1916 = vunpack.c.l.b16 %v1872
        %v1917 = vunpack.c.h.b16 %v1872
        %v1918 = vunpack.c.l.b16 %v1873
        %v1919 = vunpack.c.h.b16 %v1873
        %v1920 = vunpack.c.l.b16 %v1874
        %v1921 = vunpack.c.h.b16 %v1874
        %v1922 = vunpack.c.l.b16 %v1875
        %v1923 = vunpack.c.h.b16 %v1875
        %v1924 = vunpack.c.l.b16 %v1876
        %v1925 = vunpack.c.h.b16 %v1876
        %v1926 = vunpack.c.l.b16 %v1877
        %v1927 = vunpack.c.h.b16 %v1877
        %v1928 = vunpack.c.l.b16 %v1878
        %v1929 = vunpack.c.h.b16 %v1878
        %v1930 = vunpack.c.l.b16 %v1879
        %v1931 = vunpack.c.h.b16 %v1879
        %v1932 = vunpack.c.l.b16 %v1880
        %v1933 = vunpack.c.h.b16 %v1880
        %v1934 = vunpack.c.l.b16 %v1881
        %v1935 = vunpack.c.h.b16 %v1881
        %v1936 = vunpack.c.l.b16 %v1882
        %v1937 = vunpack.c.h.b16 %v1882
        %v1938 = vpack.c.b16 %v1908, %v1906
        %v1939 = vpack.c.b16 %v1909, %v1907
        %v1940 = vpack.c.b16 %v1912, %v1910
        %v1941 = vpack.c.b16 %v1913, %v1911
        %v1942 = vpack.c.b16 %v1916, %v1914
        %v1943 = vpack.c.b16 %v1917, %v1915
        %v1944 = vpack.c.b16 %v1920, %v1918
        %v1945 = vpack.c.b16 %v1921, %v1919
        %v1946 = vpack.c.b16 %v1924, %v1922
        %v1947 = vpack.c.b16 %v1925, %v1923
        %v1948 = vpack.c.b16 %v1928, %v1926
        %v1949 = vpack.c.b16 %v1929, %v1927
        %v1950 = vpack.c.b16 %v1932, %v1930
        %v1951 = vpack.c.b16 %v1933, %v1931
        %v1952 = vpack.c.b16 %v1936, %v1934
        %v1953 = vpack.c.b16 %v1937, %v1935
        %1970 = vmatpush.bf16.msra.mxu0 %v1952
        %1971 = vmatpush.bf16.msra.mxu0 %v1950
        %1972 = vmatpush.bf16.msra.mxu0 %v1948
        %1973 = vmatpush.bf16.msra.mxu0 %v1946
        %1974 = vmatpush.bf16.msra.mxu0 %v1944
        %1975 = vmatpush.bf16.msra.mxu0 %v1942
        %1976 = vmatpush.bf16.msra.mxu0 %v1940
        %1977 = vmatpush.bf16.msra.mxu0 %v1938
        %1978 = vmatmul.bf16.gmra.mxu0 %v1883
        %v1979 = vpop.f32.mrf.mxu0
        %v1980 = vadd.f32 %v1886, %v1979
        %v1981 = vpop.f32.mrf.mxu0
        %1982 = vdwg.mxu0
        %1983 = vmatpush.bf16.msra.mxu0 %v1953
        %1984 = vmatpush.bf16.msra.mxu0 %v1951
        %1985 = vmatpush.bf16.msra.mxu0 %v1949
        %1986 = vmatpush.bf16.msra.mxu0 %v1947
        %1987 = vmatpush.bf16.msra.mxu0 %v1945
        %1988 = vmatpush.bf16.msra.mxu0 %v1943
        %1989 = vmatpush.bf16.msra.mxu0 %v1941
        %1990 = vmatpush.bf16.msra.mxu0 %v1939
        %1991 = vmatmul.bf16.gmra.mxu0 %v1883
        %v1992 = vpop.f32.mrf.mxu0
        %v1993 = vadd.f32 %v1887, %v1992
        %v1994 = vpop.f32.mrf.mxu0
        %1995 = vdwg.mxu0
        %v1996 = vmul.f32 %v1980, 0.5
        %v1997 = vmul.f32 %v1993, 0.5
        %v1998 = vmul.f32 %v1980, 0.044715
        %v1999 = vmul.f32 %v1993, 0.044715
        %v2000 = vmul.f32 %v1998, %v1980
        %v2001 = vmul.f32 %v1999, %v1993
        %v2002 = vmul.f32 %v2000, %v1980
        %v2003 = vmul.f32 %v2001, %v1993
        %v2004 = vadd.f32 %v1980, %v2002
        %v2005 = vadd.f32 %v1993, %v2003
        %v2006 = vmul.f32 %v2004, 0.7978846
        %v2007 = vmul.f32 %v2005, 0.7978846
        %v2008 = vtanh.pop %v2006
        %v2009 = vtanh.pop %v2007
        %v2010 = vadd.f32 %v2008, 1.0
        %v2011 = vadd.f32 %v2009, 1.0
        %v2012 = vmul.f32 %v1996, %v2010
        %v2013 = vmul.f32 %v1997, %v2011
        %v2014 = vld [vmem:[%s861] sm:$0xf]
        %v2015 = vld [vmem:[%s861 + $0x4] sm:$0xf]
        %v2016 = vld [vmem:[%s861 + $0x8] sm:$0xf]
        %v2017 = vld [vmem:[%s861 + $0xc] sm:$0xf]
        %v2018 = vld [vmem:[%s861 + $0x10] sm:$0xf]
        %v2019 = vld [vmem:[%s861 + $0x14] sm:$0xf]
        %v2020 = vld [vmem:[%s861 + $0x18] sm:$0xf]
        %v2021 = vld [vmem:[%s861 + $0x1c] sm:$0xf]
        %v2022 = vld [vmem:[%s861 + $0x20] sm:$0xf]
        %v2023 = vld [vmem:[%s861 + $0x24] sm:$0xf]
        %v2024 = vld [vmem:[%s861 + $0x28] sm:$0xf]
        %v2025 = vld [vmem:[%s861 + $0x2c] sm:$0xf]
        %v2026 = vld [vmem:[%s861 + $0x30] sm:$0xf]
        %v2027 = vld [vmem:[%s861 + $0x34] sm:$0xf]
        %v2028 = vld [vmem:[%s861 + $0x38] sm:$0xf]
        %v2029 = vld [vmem:[%s861 + $0x3c] sm:$0xf]
        %v2030 = vld [vmem:[%s861 + $0x40] sm:$0xf]
        %v2031 = vld [vmem:[%s861 + $0x44] sm:$0xf]
        %v2032 = vld [vmem:[%s861 + $0x48] sm:$0xf]
        %v2033 = vld [vmem:[%s861 + $0x4c] sm:$0xf]
        %v2034 = vld [vmem:[%s861 + $0x50] sm:$0xf]
        %v2035 = vld [vmem:[%s861 + $0x54] sm:$0xf]
        %v2036 = vld [vmem:[%s861 + $0x58] sm:$0xf]
        %v2037 = vld [vmem:[%s861 + $0x5c] sm:$0xf]
        %v2038 = vld [vmem:[%s861 + $0x60] sm:$0xf]
        %v2039 = vld [vmem:[%s861 + $0x64] sm:$0xf]
        %v2040 = vld [vmem:[%s861 + $0x68] sm:$0xf]
        %v2041 = vld [vmem:[%s861 + $0x6c] sm:$0xf]
        %v2042 = vld [vmem:[%s861 + $0x70] sm:$0xf]
        %v2043 = vld [vmem:[%s861 + $0x74] sm:$0xf]
        %v2044 = vld [vmem:[%s861 + $0x78] sm:$0xf]
        %v2045 = vld [vmem:[%s861 + $0x7c] sm:$0xf]
        %v2046 = vpack.c.bf16 %v2012, %v2012
        %v2047 = vpack.c.bf16 %v2013, %v2013
        %v2048 = vld [vmem:[%s1013] sm:$0x1]
        %v2050 = vperm.slane %v2048, 0
        %v2084 = vunpack.c.l.b16 %v2014
        %v2085 = vunpack.c.l.b16 %v2015
        %v2086 = vunpack.c.l.b16 %v2016
        %v2087 = vunpack.c.l.b16 %v2017
        %v2088 = vunpack.c.l.b16 %v2018
        %v2089 = vunpack.c.l.b16 %v2019
        %v2090 = vunpack.c.l.b16 %v2020
        %v2091 = vunpack.c.l.b16 %v2021
        %v2092 = vunpack.c.l.b16 %v2022
        %v2093 = vunpack.c.l.b16 %v2023
        %v2094 = vunpack.c.l.b16 %v2024
        %v2095 = vunpack.c.l.b16 %v2025
        %v2096 = vunpack.c.l.b16 %v2026
        %v2097 = vunpack.c.l.b16 %v2027
        %v2098 = vunpack.c.l.b16 %v2028
        %v2099 = vunpack.c.l.b16 %v2029
        %v2100 = vunpack.c.l.b16 %v2030
        %v2101 = vunpack.c.l.b16 %v2031
        %v2102 = vunpack.c.l.b16 %v2032
        %v2103 = vunpack.c.l.b16 %v2033
        %v2104 = vunpack.c.l.b16 %v2034
        %v2105 = vunpack.c.l.b16 %v2035
        %v2106 = vunpack.c.l.b16 %v2036
        %v2107 = vunpack.c.l.b16 %v2037
        %v2108 = vunpack.c.l.b16 %v2038
        %v2109 = vunpack.c.l.b16 %v2039
        %v2110 = vunpack.c.l.b16 %v2040
        %v2111 = vunpack.c.l.b16 %v2041
        %v2112 = vunpack.c.l.b16 %v2042
        %v2113 = vunpack.c.l.b16 %v2043
        %v2114 = vunpack.c.l.b16 %v2044
        %v2115 = vunpack.c.l.b16 %v2045
        %v2116 = vpack.c.b16 %v2085, %v2084
        %v2117 = vpack.c.b16 %v2087, %v2086
        %v2118 = vpack.c.b16 %v2089, %v2088
        %v2119 = vpack.c.b16 %v2091, %v2090
        %v2120 = vpack.c.b16 %v2093, %v2092
        %v2121 = vpack.c.b16 %v2095, %v2094
        %v2122 = vpack.c.b16 %v2097, %v2096
        %v2123 = vpack.c.b16 %v2099, %v2098
        %v2124 = vpack.c.b16 %v2101, %v2100
        %v2125 = vpack.c.b16 %v2103, %v2102
        %v2126 = vpack.c.b16 %v2105, %v2104
        %v2127 = vpack.c.b16 %v2107, %v2106
        %v2128 = vpack.c.b16 %v2109, %v2108
        %v2129 = vpack.c.b16 %v2111, %v2110
        %v2130 = vpack.c.b16 %v2113, %v2112
        %v2131 = vpack.c.b16 %v2115, %v2114
        %2148 = vmatpush.bf16.msra.mxu0 %v2123
        %2149 = vmatpush.bf16.msra.mxu0 %v2122
        %2150 = vmatpush.bf16.msra.mxu0 %v2121
        %2151 = vmatpush.bf16.msra.mxu0 %v2120
        %2152 = vmatpush.bf16.msra.mxu0 %v2119
        %2153 = vmatpush.bf16.msra.mxu0 %v2118
        %2154 = vmatpush.bf16.msra.mxu0 %v2117
        %2155 = vmatpush.bf16.msra.mxu0 %v2116
        %2156 = vmatmul.bf16.gmra.mxu0 %v2046
        %v2157 = vpop.f32.mrf.mxu0
        %v2158 = vadd.f32 %v2050, %v2157
        %v2159 = vpop.f32.mrf.mxu0
        %2160 = vdwg.mxu0
        %2161 = vmatpush.bf16.msra.mxu0 %v2131
        %2162 = vmatpush.bf16.msra.mxu0 %v2130
        %2163 = vmatpush.bf16.msra.mxu0 %v2129
        %2164 = vmatpush.bf16.msra.mxu0 %v2128
        %2165 = vmatpush.bf16.msra.mxu0 %v2127
        %2166 = vmatpush.bf16.msra.mxu0 %v2126
        %2167 = vmatpush.bf16.msra.mxu0 %v2125
        %2168 = vmatpush.bf16.msra.mxu0 %v2124
        %2169 = vmatmul.bf16.gmra.mxu0 %v2047
        %v2170 = vpop.f32.mrf.mxu0
        %v2171 = vadd.f32 %v2158, %v2170
        %v2172 = vpop.f32.mrf.mxu0
        %2173 = vdwg.mxu0
        %v2174 = vadd.f32 %v2171, %v1866
        %v2175 = vld [vmem:[%s1016] sm:$0x1]
        %v2176 = vld [vmem:[%s1019] sm:$0x1]
        %2177 = vadd.xlane.f32.xlu0 %v2174
        %v2178 = vpop.xlane.xlu0 %2177
        %v2179 = vmul.f32 %v2178, %v1840
        %v2180 = vsub.f32 %v2174, %v2179
        %v2181 = vmul.f32 %v2180, %v2180
        %2182 = vadd.xlane.f32.xlu0 %v2181
        %v2183 = vpop.xlane.xlu0 %2182
        %v2184 = vmul.f32 %v2183, %v1840
        %v2185 = vadd.f32 %v2184, 1e-12
        %v2186 = vrsqrt.pop %v2185
        %v2187 = vmul.f32 %v2186, %v2185
        %v2188 = vmul.f32 %v2187, %v2186
        %v2189 = vmul.f32 0.5, %v2188
        %v2190 = vsub.f32 1.5, %v2189
        %v2191 = vmul.f32 %v2186, %v2190
        %vm2192 = vweird.f32 %v2185
        %vm2193 = vweird.f32 %v2186
        %vm2194 = vmor %vm2192, %vm2193
        %v2195 = vsel %vm2194, %v2186, %v2191
        %v2196 = vmul.f32 %v2180, %v2195
        %v2198 = vperm.slane %v2175, 0
        %v2200 = vmul.f32 %v2196, %v2198
        %v2202 = vperm.slane %v2176, 0
        %v2204 = vadd.f32 %v2200, %v2202
        %2205 = vst [vmem:[#allocation2] sm:$0xff] %v2204
        %p2206 = scmp.eq.s32.totalorder %s53, 1
        // Predicated region
        $region129: #{nlu_forward.1} parent=107 // pred_check
          %p2207 = pneg %p2206
        $region130: #{nlu_forward.1} parent=107 // pred_check_branch
          %2209 = sbr.rel (%p2207) target = $region132
        $region131: #{nlu_forward.1} parent=107 // pred_region
          %v2210 = vld [vmem:[%s16] sm:$0xf]
          %v2211 = vld [vmem:[%s16 + $0x4] sm:$0xf]
          %v2212 = vld [vmem:[%s16 + $0x8] sm:$0xf]
          %v2213 = vld [vmem:[%s16 + $0xc] sm:$0xf]
          %v2214 = vld [vmem:[%s16 + $0x10] sm:$0xf]
          %v2215 = vld [vmem:[%s16 + $0x14] sm:$0xf]
          %v2216 = vld [vmem:[%s16 + $0x18] sm:$0xf]
          %v2217 = vld [vmem:[%s16 + $0x1c] sm:$0xf]
          %v2218 = vld [vmem:[%s16 + $0x20] sm:$0xf]
          %v2219 = vld [vmem:[%s16 + $0x24] sm:$0xf]
          %v2220 = vld [vmem:[%s16 + $0x28] sm:$0xf]
          %v2221 = vld [vmem:[%s16 + $0x2c] sm:$0xf]
          %v2222 = vld [vmem:[%s16 + $0x30] sm:$0xf]
          %v2223 = vld [vmem:[%s16 + $0x34] sm:$0xf]
          %v2224 = vld [vmem:[%s16 + $0x38] sm:$0xf]
          %v2225 = vld [vmem:[%s16 + $0x3c] sm:$0xf]
          %v2226 = vpack.c.bf16 %v2204, %v2204
          %v2227 = vld [vmem:[%s17] sm:$0x1]
          %v2244 = vunpack.c.l.b16 %v2210
          %v2245 = vunpack.c.l.b16 %v2211
          %v2246 = vunpack.c.l.b16 %v2212
          %v2247 = vunpack.c.l.b16 %v2213
          %v2248 = vunpack.c.l.b16 %v2214
          %v2249 = vunpack.c.l.b16 %v2215
          %v2250 = vunpack.c.l.b16 %v2216
          %v2251 = vunpack.c.l.b16 %v2217
          %v2252 = vunpack.c.l.b16 %v2218
          %v2253 = vunpack.c.l.b16 %v2219
          %v2254 = vunpack.c.l.b16 %v2220
          %v2255 = vunpack.c.l.b16 %v2221
          %v2256 = vunpack.c.l.b16 %v2222
          %v2257 = vunpack.c.l.b16 %v2223
          %v2258 = vunpack.c.l.b16 %v2224
          %v2259 = vunpack.c.l.b16 %v2225
          %v2260 = vpack.c.b16 %v2245, %v2244
          %v2261 = vpack.c.b16 %v2247, %v2246
          %v2262 = vpack.c.b16 %v2249, %v2248
          %v2263 = vpack.c.b16 %v2251, %v2250
          %v2264 = vpack.c.b16 %v2253, %v2252
          %v2265 = vpack.c.b16 %v2255, %v2254
          %v2266 = vpack.c.b16 %v2257, %v2256
          %v2267 = vpack.c.b16 %v2259, %v2258
          %2276 = vmatpush.bf16.msra.mxu0 %v2267
          %2277 = vmatpush.bf16.msra.mxu0 %v2266
          %2278 = vmatpush.bf16.msra.mxu0 %v2265
          %2279 = vmatpush.bf16.msra.mxu0 %v2264
          %2280 = vmatpush.bf16.msra.mxu0 %v2263
          %2281 = vmatpush.bf16.msra.mxu0 %v2262
          %2282 = vmatpush.bf16.msra.mxu0 %v2261
          %2283 = vmatpush.bf16.msra.mxu0 %v2260
          %2284 = vmatmul.bf16.gmra.mxu0 %v2226
          %v2285 = vpop.f32.mrf.mxu0
          %v2286 = vadd.f32 %v2227, %v2285
          %v2287 = vpop.f32.mrf.mxu0
          %2288 = vdwg.mxu0
          %v2289 = vtanh.pop %v2286
          %v2290 = vld [vmem:[%s18] sm:$0xf]
          %v2291 = vld [vmem:[%s18 + $0x4] sm:$0xf]
          %v2292 = vld [vmem:[%s18 + $0x8] sm:$0xf]
          %v2293 = vld [vmem:[%s18 + $0xc] sm:$0xf]
          %v2294 = vld [vmem:[%s18 + $0x10] sm:$0xf]
          %v2295 = vld [vmem:[%s18 + $0x14] sm:$0xf]
          %v2296 = vld [vmem:[%s18 + $0x18] sm:$0xf]
          %v2297 = vld [vmem:[%s18 + $0x1c] sm:$0xf]
          %v2298 = vld [vmem:[%s18 + $0x20] sm:$0xf]
          %v2299 = vld [vmem:[%s18 + $0x24] sm:$0xf]
          %v2300 = vld [vmem:[%s18 + $0x28] sm:$0xf]
          %v2301 = vld [vmem:[%s18 + $0x2c] sm:$0xf]
          %v2302 = vld [vmem:[%s18 + $0x30] sm:$0xf]
          %v2303 = vld [vmem:[%s18 + $0x34] sm:$0xf]
          %v2304 = vld [vmem:[%s18 + $0x38] sm:$0xf]
          %v2305 = vld [vmem:[%s18 + $0x3c] sm:$0xf]
          %v2306 = vpack.c.bf16 %v2289, %v2289
          %v2307 = vld [vmem:[%s19] sm:$0x1]
          %v2324 = vunpack.c.l.b16 %v2290
          %v2325 = vunpack.c.l.b16 %v2291
          %v2326 = vunpack.c.l.b16 %v2292
          %v2327 = vunpack.c.l.b16 %v2293
          %v2328 = vunpack.c.l.b16 %v2294
          %v2329 = vunpack.c.l.b16 %v2295
          %v2330 = vunpack.c.l.b16 %v2296
          %v2331 = vunpack.c.l.b16 %v2297
          %v2332 = vunpack.c.l.b16 %v2298
          %v2333 = vunpack.c.l.b16 %v2299
          %v2334 = vunpack.c.l.b16 %v2300
          %v2335 = vunpack.c.l.b16 %v2301
          %v2336 = vunpack.c.l.b16 %v2302
          %v2337 = vunpack.c.l.b16 %v2303
          %v2338 = vunpack.c.l.b16 %v2304
          %v2339 = vunpack.c.l.b16 %v2305
          %v2340 = vpack.c.b16 %v2325, %v2324
          %v2341 = vpack.c.b16 %v2327, %v2326
          %v2342 = vpack.c.b16 %v2329, %v2328
          %v2343 = vpack.c.b16 %v2331, %v2330
          %v2344 = vpack.c.b16 %v2333, %v2332
          %v2345 = vpack.c.b16 %v2335, %v2334
          %v2346 = vpack.c.b16 %v2337, %v2336
          %v2347 = vpack.c.b16 %v2339, %v2338
          %2356 = vmatpush.bf16.msra.mxu0 %v2347
          %2357 = vmatpush.bf16.msra.mxu0 %v2346
          %2358 = vmatpush.bf16.msra.mxu0 %v2345
          %2359 = vmatpush.bf16.msra.mxu0 %v2344
          %2360 = vmatpush.bf16.msra.mxu0 %v2343
          %2361 = vmatpush.bf16.msra.mxu0 %v2342
          %2362 = vmatpush.bf16.msra.mxu0 %v2341
          %2363 = vmatpush.bf16.msra.mxu0 %v2340
          %2364 = vmatmul.bf16.gmra.mxu0 %v2306
          %v2365 = vpop.f32.mrf.mxu0
          %v2366 = vadd.f32 %v2307, %v2365
          %v2367 = vpop.f32.mrf.mxu0
          %2368 = vdwg.mxu0
          %2369 = vst [vmem:[%s974] sm:$0x1] %v2366
          %v2370 = vld [vmem:[#allocation9] sm:$0xf]
          %v2371 = vld [vmem:[#allocation9 + $0x4] sm:$0xf]
          %v2372 = vld [vmem:[#allocation9 + $0x8] sm:$0xf]
          %v2373 = vld [vmem:[#allocation9 + $0xc] sm:$0xf]
          %v2374 = vld [vmem:[#allocation9 + $0x10] sm:$0xf]
          %v2375 = vld [vmem:[#allocation9 + $0x14] sm:$0xf]
          %v2376 = vld [vmem:[#allocation9 + $0x18] sm:$0xf]
          %v2377 = vld [vmem:[#allocation9 + $0x1c] sm:$0xf]
          %v2378 = vld [vmem:[#allocation9 + $0x20] sm:$0xf]
          %v2379 = vld [vmem:[#allocation9 + $0x24] sm:$0xf]
          %v2380 = vld [vmem:[#allocation9 + $0x28] sm:$0xf]
          %v2381 = vld [vmem:[#allocation9 + $0x2c] sm:$0xf]
          %v2382 = vld [vmem:[#allocation9 + $0x30] sm:$0xf]
          %v2383 = vld [vmem:[#allocation9 + $0x34] sm:$0xf]
          %v2384 = vld [vmem:[#allocation9 + $0x38] sm:$0xf]
          %v2385 = vld [vmem:[#allocation9 + $0x3c] sm:$0xf]
          %v2386 = vld [vmem:[%s21] sm:$0x1]
          %v2388 = vperm.slane %v2386, 0
          %v2406 = vunpack.c.l.b16 %v2370
          %v2407 = vunpack.c.l.b16 %v2371
          %v2408 = vunpack.c.l.b16 %v2372
          %v2409 = vunpack.c.l.b16 %v2373
          %v2410 = vunpack.c.l.b16 %v2374
          %v2411 = vunpack.c.l.b16 %v2375
          %v2412 = vunpack.c.l.b16 %v2376
          %v2413 = vunpack.c.l.b16 %v2377
          %v2414 = vunpack.c.l.b16 %v2378
          %v2415 = vunpack.c.l.b16 %v2379
          %v2416 = vunpack.c.l.b16 %v2380
          %v2417 = vunpack.c.l.b16 %v2381
          %v2418 = vunpack.c.l.b16 %v2382
          %v2419 = vunpack.c.l.b16 %v2383
          %v2420 = vunpack.c.l.b16 %v2384
          %v2421 = vunpack.c.l.b16 %v2385
          %v2422 = vpack.c.b16 %v2407, %v2406
          %v2423 = vpack.c.b16 %v2409, %v2408
          %v2424 = vpack.c.b16 %v2411, %v2410
          %v2425 = vpack.c.b16 %v2413, %v2412
          %v2426 = vpack.c.b16 %v2415, %v2414
          %v2427 = vpack.c.b16 %v2417, %v2416
          %v2428 = vpack.c.b16 %v2419, %v2418
          %v2429 = vpack.c.b16 %v2421, %v2420
          %2438 = vmatpush.bf16.msra.mxu0 %v2429
          %2439 = vmatpush.bf16.msra.mxu0 %v2428
          %2440 = vmatpush.bf16.msra.mxu0 %v2427
          %2441 = vmatpush.bf16.msra.mxu0 %v2426
          %2442 = vmatpush.bf16.msra.mxu0 %v2425
          %2443 = vmatpush.bf16.msra.mxu0 %v2424
          %2444 = vmatpush.bf16.msra.mxu0 %v2423
          %2445 = vmatpush.bf16.msra.mxu0 %v2422
          %2446 = vmatmul.bf16.gmra.mxu0 %v2226
          %v2447 = vpop.f32.mrf.mxu0
          %v2448 = vadd.f32 %v2388, %v2447
          %v2449 = vpop.f32.mrf.mxu0
          %2450 = vdwg.mxu0
          %2451 = vst [vmem:[%s981] sm:$0xff] %v2448
        $region132: #{nlu_forward.1} parent=107 // pred_fallthru
          _
        %s2452 = sand.u32 %s600, 1
        %s2453 = scalar_lea.sflag [#allocation5], %s2452
        %s2454 = sand.u32 %s600, 1
        %s2455 = scalar_lea.vmem [#allocation11], %s2454
        %s2456 = sand.u32 %s626, 1
        %s2457 = scalar_lea.sflag [#allocation13], %s2456
        %s2458 = sand.u32 %s626, 1
        %s2459 = smul.addr %s2458, 8
        %s2460 = scalar_lea.vmem [#allocation12], %s2459
        // Predicated region
        $region133: #{nlu_forward.1} parent=107 // pred_check
          %p2461 = pneg %p610
        $region134: #{nlu_forward.1} parent=107 // pred_check_branch
          %2463 = sbr.rel (%p2461) target = $region136
        $region135: #{nlu_forward.1} parent=107 // pred_region
          %2465 = vsyncadd %s2453, 0
          %s2466 = scalar_lea.hbm %s22, %s52
          %s2468 = sshll.u32 %s2455, 4
          %s2469 = int_to_ptr.vmem [resolvable:$true] %s2468
          %s2470 = sshll.u32 %s2466, 4
          %s2471 = int_to_ptr.hbm [resolvable:$true] %s2470
          %2473 = dma.vmem_to_hbm [thread:$0]  %s2469, 16, %s2471, %s2453
        $region136: #{nlu_forward.1} parent=107 // pred_fallthru
          _
        // Predicated region
        $region137: #{nlu_forward.1} parent=107 // pred_check
          %p2474 = pneg %p636
        $region138: #{nlu_forward.1} parent=107 // pred_check_branch
          %2476 = sbr.rel (%p2474) target = $region140
        $region139: #{nlu_forward.1} parent=107 // pred_region
          %2478 = vsyncadd %s2457, 0
          %s2479 = smul.addr %s52, 8
          %s2480 = scalar_lea.hbm %s23, %s2479
          %s2482 = sshll.u32 %s2460, 4
          %s2483 = int_to_ptr.vmem [resolvable:$true] %s2482
          %s2484 = sshll.u32 %s2480, 4
          %s2485 = int_to_ptr.hbm [resolvable:$true] %s2484
          %2487 = dma.vmem_to_hbm [thread:$0]  %s2483, 128, %s2485, %s2457
        $region140: #{nlu_forward.1} parent=107 // pred_fallthru
          _
      $region108: #{nlu_forward.1} parent=5 // pred_fallthru
        _
      %p2488 = scmp.le.s32.totalorder 2, %s43
      // Predicated region
      $region141: #{nlu_forward.1} parent=5 // pred_check
        %p2489 = pneg %p2488
      $region142: #{nlu_forward.1} parent=5 // pred_check_branch
        %2491 = sbr.rel (%p2489) target = $region144
      $region143: #{nlu_forward.1} parent=5 // pred_region
        %s2492 = ssub.s32 %s43, 2
        // Predicated region
        $region145: #{nlu_forward.1} parent=143 // pred_check
          %p2493 = pneg %p616
        $region146: #{nlu_forward.1} parent=143 // pred_check_branch
          %2495 = sbr.rel (%p2493) target = $region148
        $region147: #{nlu_forward.1} parent=143 // pred_region
          %s2496 = sand.u32 %s601, 1
          %s2497 = scalar_lea.sflag [#allocation5], %s2496
          %s2498 = sand.u32 %s601, 1
          %s2499 = scalar_lea.vmem [#allocation11], %s2498
          %2501 = dma.done %s2497, 16
        $region148: #{nlu_forward.1} parent=143 // pred_fallthru
          _
        // Predicated region
        $region149: #{nlu_forward.1} parent=143 // pred_check
          %p2502 = pneg %p642
        $region150: #{nlu_forward.1} parent=143 // pred_check_branch
          %2504 = sbr.rel (%p2502) target = $region152
        $region151: #{nlu_forward.1} parent=143 // pred_region
          %s2505 = sand.u32 %s627, 1
          %s2506 = scalar_lea.sflag [#allocation13], %s2505
          %s2507 = sand.u32 %s627, 1
          %s2508 = smul.addr %s2507, 8
          %s2509 = scalar_lea.vmem [#allocation12], %s2508
          %2511 = dma.done %s2506, 128
        $region152: #{nlu_forward.1} parent=143 // pred_fallthru
          _
      $region144: #{nlu_forward.1} parent=5 // pred_fallthru
        _
    $region6: #{nlu_forward.1} parent=1 // loop_footer
      %s47 = sadd.s32 1, %s43
    $region7: #{nlu_forward.1} parent=1 // loop_footer_branch
      %42 = sbr.rel target = $region3
    $region8: #{nlu_forward.1} parent=1 // loop_exit
      _
    %2512 = vsyncpa [#allocation4], 1
    %s2513 = scalar_lea.sflag [#allocation4], 1
    %2514 = vsyncpa %s2513, 1
    %2515 = vsyncpa [#allocation7], 1
    %s2516 = scalar_lea.sflag [#allocation7], 1
    %2517 = vsyncpa %s2516, 1
    %2518 = vsyncpa [#allocation10], 1
    %2519 = vsyncpa [#allocation5], 1
    %s2520 = scalar_lea.sflag [#allocation5], 1
    %2521 = vsyncpa %s2520, 1
    %2522 = vsyncpa [#allocation13], 1
    %s2523 = scalar_lea.sflag [#allocation13], 1
    %2524 = vsyncpa %s2523, 1

</llo_original>
